<compile_context>
chip_gen: v7x
topology: tpu7x:2x2x1
jax: 0.10.0
libtpu: 0.0.40
codegen_flags: <defaults>
</compile_context>

<pallas_src>
import math

import numpy as np
import jax
import jax.numpy as jnp
from jax import lax
from jax.experimental import pallas as pl
from jax.experimental.pallas import tpu as pltpu


# ----------------------------------------------------------------------------
# Laplacian buffer (host-side, computed once — mirrors the PyTorch helper)
# ----------------------------------------------------------------------------
def calculate_laplacian_with_self_loop(adj: jnp.ndarray) -> jnp.ndarray:
    n = adj.shape[0]
    m = adj + jnp.eye(n, dtype=adj.dtype)
    row_sum = m.sum(axis=1)
    d_inv_sqrt = row_sum ** -0.5
    d_inv_sqrt = jnp.where(jnp.isinf(d_inv_sqrt), 0.0, d_inv_sqrt)
    d_mat = jnp.diag(d_inv_sqrt)
    return (m @ d_mat).T @ d_mat


# ----------------------------------------------------------------------------
# Tile-size heuristic
# ----------------------------------------------------------------------------
def _pick_tile_n(n_nodes, lap_row_bytes, sublane, max_stripe_bytes=4 << 20):
    """Largest power-of-two multiple of `sublane` that (a) divides N, (b) leaves
    >= 2 grid steps (v7x megacore / DMA-compute overlap), and (c) keeps one
    streamed lap stripe <= max_stripe_bytes (double-buffered it fits v7x's
    64 MiB VMEM, yet at realistic N it is still 512+ rows, amortizing the
    ~0.35 us/step overhead on v5e/v6e).  Falls back to N for tiny / indivisible
    graphs (single step)."""
    best = None
    t = sublane
    while t <= n_nodes // 2:
        if n_nodes % t == 0 and t * lap_row_bytes <= max_stripe_bytes:
            best = t
        t *= 2
    return best if best is not None else n_nodes


# ----------------------------------------------------------------------------
# Fused Pallas kernel: one Laplacian row stripe per grid step
# ----------------------------------------------------------------------------
def gcn_pallas(lap_bf16, x_nm_bf16, w_pad, *, batch, input_dim, output_dim,
               tile_n=None):
    """Returns the lane-dense node-major output slab (N, batch*Dp) in f32."""
    n_nodes = lap_bf16.shape[0]
    k = x_nm_bf16.shape[1]                    # batch * input_dim
    dp = w_pad.shape[1]                       # padded output_dim (lane-dense)
    assert k == batch * input_dim

    sublane = 8 * (4 // lap_bf16.dtype.itemsize)      # 16 rows for bf16 packing
    if tile_n is None:
        tile_n = _pick_tile_n(n_nodes, n_nodes * lap_bf16.dtype.itemsize, sublane)
    assert n_nodes % tile_n == 0
    assert tile_n == n_nodes or tile_n % sublane == 0
    grid = (n_nodes // tile_n,)

    def kernel(lap_ref, x_ref, w_ref, out_ref):
        # (tile_n, N) bf16 @ (N, B*Din) bf16 -> f32 accumulation on the MXU.
        ax = jnp.dot(lap_ref[...], x_ref[...], preferred_element_type=jnp.float32)
        w = w_ref[...]
        # One shared (Din, Dp) weight applied to each batch slice of ax — no
        # block-diagonal kron, no zero-block MXU work.  Din is tiny, so HIGHEST
        # precision here is essentially free relative to the L@X stream.
        pieces = [
            jnp.dot(ax[:, b * input_dim:(b + 1) * input_dim], w,
                    precision=lax.Precision.HIGHEST,
                    preferred_element_type=jnp.float32)
            for b in range(batch)
        ]
        pre = pieces[0] if batch == 1 else jnp.concatenate(pieces, axis=-1)
        out_ref[...] = jnp.tanh(pre)          # EUP; full-lane (B*Dp % 128 == 0) store

    # VMEM budget: double-buffered lap stripe + single-buffered residents +
    # double-buffered output stripe (plus 2x headroom, 16 MiB floor, 48 MiB cap
    # so it always fits under v7x's 64 MiB physical VMEM).
    lap_bytes = 2 * tile_n * n_nodes * lap_bf16.dtype.itemsize
    x_bytes = n_nodes * k * x_nm_bf16.dtype.itemsize
    w_bytes = input_dim * dp * w_pad.dtype.itemsize
    out_bytes = 2 * tile_n * batch * dp * 4
    need = lap_bytes + x_bytes + w_bytes + out_bytes
    vmem_limit = int(min(max(2 * need, 16 << 20), 48 << 20))

    # Useful work only (no padded / zero-block terms).
    flops = 2 * n_nodes * n_nodes * k + 2 * n_nodes * k * output_dim
    bytes_accessed = (n_nodes * n_nodes * lap_bf16.dtype.itemsize
                      + n_nodes * k * x_nm_bf16.dtype.itemsize
                      + input_dim * output_dim * w_pad.dtype.itemsize
                      + n_nodes * batch * output_dim * 4)

    return pl.pallas_call(
        kernel,
        out_shape=jax.ShapeDtypeStruct((n_nodes, batch * dp), jnp.float32),
        grid_spec=pltpu.PrefetchScalarGridSpec(
            num_scalar_prefetch=0,
            grid=grid,
            in_specs=[
                # Streamed Laplacian row stripe (default double-buffering).
                pl.BlockSpec((tile_n, n_nodes), lambda i: (i, 0)),
                # Resident operands: constant index_map -> single-buffer them so
                # the freed VMEM goes to the lap stripe instead.
                pl.BlockSpec((n_nodes, k), lambda i: (0, 0),
                             pipeline_mode=pl.Buffered(1)),
                pl.BlockSpec((input_dim, dp), lambda i: (0, 0),
                             pipeline_mode=pl.Buffered(1)),
            ],
            out_specs=pl.BlockSpec((tile_n, batch * dp), lambda i: (i, 0)),
        ),
        compiler_params=pltpu.CompilerParams(
            dimension_semantics=("parallel",),
            vmem_limit_bytes=vmem_limit,
        ),
        cost_estimate=pl.CostEstimate(
            flops=flops,
            transcendentals=n_nodes * batch * output_dim,
            bytes_accessed=bytes_accessed,
        ),
    )(lap_bf16, x_nm_bf16, w_pad)


# ----------------------------------------------------------------------------
# Forward wrapper (host glue is pure layout plumbing: transpose + lane padding)
# ----------------------------------------------------------------------------
def gcn_forward(x, lap, w):
    """x: (B, Din, N) f32, lap: (N, N) f32, w: (Din, Dout) f32 -> (B, N, Dout)."""
    batch, input_dim, n_nodes = x.shape
    output_dim = w.shape[1]

    # Node-major slab — exactly what the PyTorch transposes+reshape build.
    # bf16 storage for the streamed operands; accumulation stays f32 in-kernel.
    x_nm = jnp.transpose(x, (2, 0, 1)).reshape(n_nodes, batch * input_dim)
    x_nm = x_nm.astype(jnp.bfloat16)
    lap_bf16 = lap.astype(jnp.bfloat16)

    # Pad W's output columns so the kernel's output slab (batch*Dp lanes) is a
    # multiple of 128.  Padded columns produce tanh(0)=0 and are sliced off.
    lane_quot = 128 // math.gcd(batch, 128)
    dp = max(lane_quot, ((output_dim + lane_quot - 1) // lane_quot) * lane_quot)
    w_pad = jnp.zeros((input_dim, dp), w.dtype).at[:, :output_dim].set(w)

    out_nm = gcn_pallas(lap_bf16, x_nm, w_pad, batch=batch,
                        input_dim=input_dim, output_dim=output_dim)
    out = out_nm.reshape(n_nodes, batch, dp)[:, :, :output_dim]
    return jnp.transpose(out, (1, 0, 2))


# ----------------------------------------------------------------------------
# Main
# ----------------------------------------------------------------------------
if __name__ == "__main__":
    B, Din, N, Dout = 2, 8, 128, 32   # batch, input_dim, num_nodes, output_dim

    key = jax.random.PRNGKey(0)
    k_adj, k_x, k_w = jax.random.split(key, 3)

    adj = jax.random.uniform(k_adj, (N, N), jnp.float32)
    adj = 0.5 * (adj + adj.T)                 # symmetric, non-negative adjacency
    lap = calculate_laplacian_with_self_loop(adj)

    x = jax.random.normal(k_x, (B, Din, N), jnp.float32)

    # reset_parameters: xavier_uniform with gain = calculate_gain('tanh') = 5/3
    gain = 5.0 / 3.0
    bound = gain * math.sqrt(6.0 / (Din + Dout))
    w = jax.random.uniform(k_w, (Din, Dout), jnp.float32, -bound, bound)

    out = jax.block_until_ready(gcn_forward(x, lap, w))
    assert out.shape == (B, N, Dout)

    # float64 reference replicating the PyTorch forward step-by-step.
    lap64 = np.asarray(lap, np.float64)
    x64 = np.asarray(x, np.float64)
    w64 = np.asarray(w, np.float64)
    inp = np.transpose(x64, (2, 0, 1)).reshape(N, B * Din)
    ax = (lap64 @ inp).reshape(N * B, Din)
    ref = np.tanh(ax @ w64).reshape(N, B, Dout).transpose(1, 0, 2)

    # Tolerance sized for the intentional bf16 storage of lap/x (≈2x HBM win);
    # everything downstream accumulates in f32 (2nd matmul at HIGHEST).
    np.testing.assert_allclose(np.asarray(out, np.float64), ref,
                               rtol=3e-2, atol=3e-2)

    print("KERNEL_OK")
</pallas_src>

<mosaic_0001>
module attributes {stable_mosaic.version = 11 : i64} {
  func.func @kernel(%arg0: i32, %arg1: memref<64x128xbf16, #tpu.memory_space<vmem>>, %arg2: memref<128x16xbf16, #tpu.memory_space<vmem>>, %arg3: memref<8x64xf32, #tpu.memory_space<vmem>>, %arg4: memref<64x128xf32, #tpu.memory_space<vmem>>) attributes {dimension_semantics = [#tpu.dimension_semantics<parallel>], iteration_bounds = array<i64: 2>, scalar_prefetch = 0 : i64, scratch_operands = 0 : i64, tpu.core_type = #tpu.core_type<tc>, window_params = [{transform_indices = @transform_0, window_bounds = array<i64: 64, 128>}, {pipeline_mode = #tpu.pipeline_mode<synchronous>, transform_indices = @transform_1, window_bounds = array<i64: 128, 16>}, {pipeline_mode = #tpu.pipeline_mode<synchronous>, transform_indices = @transform_2, window_bounds = array<i64: 8, 64>}, {transform_indices = @transform_3, window_bounds = array<i64: 64, 128>}]} {
    %c0 = arith.constant 0 : index
    %c0_0 = arith.constant 0 : index
    %0 = vector.load %arg1[%c0, %c0_0] : memref<64x128xbf16, #tpu.memory_space<vmem>>, vector<64x128xbf16>
    %c0_1 = arith.constant 0 : index
    %c0_2 = arith.constant 0 : index
    %1 = vector.load %arg2[%c0_1, %c0_2] : memref<128x16xbf16, #tpu.memory_space<vmem>>, vector<128x16xbf16>
    %cst = arith.constant dense<0.000000e+00> : vector<64x16xf32>
    %2 = tpu.matmul %0, %1, %cst {dimension_numbers = #tpu.dot_dimension_numbers<[1], [0], [0], [1], [0, 0, 1, 1], [], []>} : vector<64x128xbf16>, vector<128x16xbf16>, vector<64x16xf32> -> vector<64x16xf32>
    %c0_3 = arith.constant 0 : index
    %c0_4 = arith.constant 0 : index
    %3 = vector.load %arg3[%c0_3, %c0_4] : memref<8x64xf32, #tpu.memory_space<vmem>>, vector<8x64xf32>
    %4 = vector.extract_strided_slice %2 {offsets = [0, 0], sizes = [64, 8], strides = [1, 1]} : vector<64x16xf32> to vector<64x8xf32>
    %cst_5 = arith.constant dense<0.000000e+00> : vector<64x64xf32>
    %5 = tpu.matmul %4, %3, %cst_5 {dimension_numbers = #tpu.dot_dimension_numbers<[1], [0], [0], [1], [0, 0, 1, 1], [], []>, precision = #tpu.contract_precision<fp32>} : vector<64x8xf32>, vector<8x64xf32>, vector<64x64xf32> -> vector<64x64xf32>
    %6 = vector.extract_strided_slice %2 {offsets = [0, 8], sizes = [64, 8], strides = [1, 1]} : vector<64x16xf32> to vector<64x8xf32>
    %cst_6 = arith.constant dense<0.000000e+00> : vector<64x64xf32>
    %7 = tpu.matmul %6, %3, %cst_6 {dimension_numbers = #tpu.dot_dimension_numbers<[1], [0], [0], [1], [0, 0, 1, 1], [], []>, precision = #tpu.contract_precision<fp32>} : vector<64x8xf32>, vector<8x64xf32>, vector<64x64xf32> -> vector<64x64xf32>
    %8 = tpu.concatenate %5, %7 in 1 : vector<64x64xf32>, vector<64x64xf32> -> vector<64x128xf32>
    %9 = math.tanh %8 : vector<64x128xf32>
    %c0_7 = arith.constant 0 : index
    %c0_8 = arith.constant 0 : index
    %10 = vector.load %arg4[%c0_7, %c0_8] : memref<64x128xf32, #tpu.memory_space<vmem>>, vector<64x128xf32>
    tpu.vector_store %arg4[%c0_7, %c0_8], %9 {strides = array<i32>} : memref<64x128xf32, #tpu.memory_space<vmem>>, vector<64x128xf32>,
    return
  }
  func.func @transform_0(%arg0: i32) -> (i32, i32) {
    %c0_i32 = arith.constant 0 : i32
    %c0_i32_0 = arith.constant 0 : i32
    return %arg0, %c0_i32 : i32, i32
  }
  func.func @transform_1(%arg0: i32) -> (i32, i32) {
    %c0_i32 = arith.constant 0 : i32
    %c0_i32_0 = arith.constant 0 : i32
    %c0_i32_1 = arith.constant 0 : i32
    return %c0_i32, %c0_i32_0 : i32, i32
  }
  func.func @transform_2(%arg0: i32) -> (i32, i32) {
    %c0_i32 = arith.constant 0 : i32
    %c0_i32_0 = arith.constant 0 : i32
    %c0_i32_1 = arith.constant 0 : i32
    return %c0_i32, %c0_i32_0 : i32, i32
  }
  func.func @transform_3(%arg0: i32) -> (i32, i32) {
    %c0_i32 = arith.constant 0 : i32
    %c0_i32_0 = arith.constant 0 : i32
    return %arg0, %c0_i32 : i32, i32
  }
}

</mosaic_0001>

<llo_original>
// kernel: tpu_custom_call.1
$region0: #{tpu_custom_call.1}
  #allocation0 [shape = 'u32[]', space=smem, size = 0x4, offset = 0x4, fixed_abs, tag = 'smem constant byte address 0x4 - core index']
  #allocation1 [shape = 'u32[144,128]{1,0:T(1,128)}', space=vmem, size = 0x12000, scoped, tag = 'internal scratch']
  %s0 = inlined_call_operand.vmem [shape: bf16[128,128], index: 0, kind: input, shape index: {}]
  %s1 = inlined_call_operand.vmem [shape: bf16[128,16], index: 1, kind: input, shape index: {}]
  %s2 = inlined_call_operand.vmem [shape: f32[8,64], index: 2, kind: input, shape index: {}]
  %s3 = inlined_call_operand.hbm [shape: f32[128,128], index: 3, kind: output, shape index: {}]
  %s4 = sld [smem:[#allocation0]]
  $region45: #{tpu_custom_call.1} parent=0
    _
  %s6 = ssub.s32 1, %s4
  %s7 = scalar_select 0, %s6, %s4
  $region1: #{tpu_custom_call.1} parent=0
    #allocation2 [shape = 'u8[65536]{0}', space=vmem, size = 0x10000, scoped, tag = 'output window, operand 0']
    #allocation3 [shape = 's32[2]{0}', space=sflag, size = 0x8, scoped, tag = 'scoped memory for tpu_custom_call.1']
    %8 = vsyncpa [#allocation3], 0
    %s9 = scalar_lea.sflag [#allocation3], 1
    %10 = vsyncpa %s9, 0
    loop: start=0, step=1, limit=4
    $region2: #{tpu_custom_call.1} parent=1 // loop_pre_header
      _
    $region3: #{tpu_custom_call.1} parent=1 // loop_header
      %s12 = sphi 0, %s16
      %p13 = scmp.ge.s32.totalorder %s12, 4
      %s22 = sphi 0, %s24
      %s25 = sphi 0, %s22
      %s26 = sphi 0, %s25
      %s42 = sphi 0, %s26
      %s46 = sphi 0, %s46
      %s48 = sphi 0, %s46
      %s49 = sphi 0, %s48
      %s63 = sphi 0, %s49
      %s67 = sphi 0, %s67
      %s69 = sphi 0, %s67
      %s70 = sphi 0, %s69
      %s84 = sphi 0, %s70
      %s90 = sphi 0, %s92
      %s93 = sphi 0, %s90
      %s94 = sphi 0, %s93
      %s110 = sphi 0, %s94
    $region4: #{tpu_custom_call.1} parent=1 // loop_header_branch
      %15 = sbr.rel (%p13) target = $region8
    $region5: #{tpu_custom_call.1} parent=1 // loop_body
      %s17 = ssub.s32 %s12, 1
      %s18 = ssub.s32 %s12, 2
      %s19 = sadd.s32 %s12, 1
      %s20 = ssub.s32 %s12, %s19
      %p21 = scmp.eq.s32.totalorder %s20, 0
      %s23 = sadd.s32 %s22, 1
      %s24 = scalar_select %p21, %s22, %s23
      %p27 = pneg %p21
      %p28 = scmp.eq.s32.totalorder %s12, 1
      %p29 = por %p27, %p28
      %p30 = scmp.ne.s32.totalorder %s22, %s25
      %p31 = scmp.eq.s32.totalorder %s12, 0
      %p32 = por %p30, %p31
      %p33 = scmp.ne.s32.totalorder %s22, %s25
      %p34 = scmp.eq.s32.totalorder %s17, 1
      %p35 = por %p33, %p34
      %p36 = scmp.ne.s32.totalorder %s25, %s26
      %p37 = scmp.eq.s32.totalorder %s17, 0
      %p38 = por %p36, %p37
      %p39 = scmp.ne.s32.totalorder %s25, %s26
      %p40 = scmp.eq.s32.totalorder %s18, 1
      %p41 = por %p39, %p40
      %p43 = scmp.ne.s32.totalorder %s26, %s42
      %p44 = scmp.eq.s32.totalorder %s18, 0
      %p45 = por %p43, %p44
      %s47 = sadd.s32 %s46, 1
      %p50 = scmp.eq.s32.totalorder %s12, 1
      %p51 = scmp.ne.s32.totalorder %s46, %s48
      %p52 = scmp.eq.s32.totalorder %s12, 0
      %p53 = por %p51, %p52
      %p54 = scmp.ne.s32.totalorder %s46, %s48
      %p55 = scmp.eq.s32.totalorder %s17, 1
      %p56 = por %p54, %p55
      %p57 = scmp.ne.s32.totalorder %s48, %s49
      %p58 = scmp.eq.s32.totalorder %s17, 0
      %p59 = por %p57, %p58
      %p60 = scmp.ne.s32.totalorder %s48, %s49
      %p61 = scmp.eq.s32.totalorder %s18, 1
      %p62 = por %p60, %p61
      %p64 = scmp.ne.s32.totalorder %s49, %s63
      %p65 = scmp.eq.s32.totalorder %s18, 0
      %p66 = por %p64, %p65
      %s68 = sadd.s32 %s67, 1
      %p71 = scmp.eq.s32.totalorder %s12, 1
      %p72 = scmp.ne.s32.totalorder %s67, %s69
      %p73 = scmp.eq.s32.totalorder %s12, 0
      %p74 = por %p72, %p73
      %p75 = scmp.ne.s32.totalorder %s67, %s69
      %p76 = scmp.eq.s32.totalorder %s17, 1
      %p77 = por %p75, %p76
      %p78 = scmp.ne.s32.totalorder %s69, %s70
      %p79 = scmp.eq.s32.totalorder %s17, 0
      %p80 = por %p78, %p79
      %p81 = scmp.ne.s32.totalorder %s69, %s70
      %p82 = scmp.eq.s32.totalorder %s18, 1
      %p83 = por %p81, %p82
      %p85 = scmp.ne.s32.totalorder %s70, %s84
      %p86 = scmp.eq.s32.totalorder %s18, 0
      %p87 = por %p85, %p86
      %s88 = ssub.s32 %s12, %s19
      %p89 = scmp.eq.s32.totalorder %s88, 0
      %s91 = sadd.s32 %s90, 1
      %s92 = scalar_select %p89, %s90, %s91
      %p95 = pneg %p89
      %p96 = scmp.eq.s32.totalorder %s12, 1
      %p97 = por %p95, %p96
      %p98 = scmp.ne.s32.totalorder %s90, %s93
      %p99 = scmp.eq.s32.totalorder %s12, 0
      %p100 = por %p98, %p99
      %p101 = scmp.ne.s32.totalorder %s90, %s93
      %p102 = scmp.eq.s32.totalorder %s17, 1
      %p103 = por %p101, %p102
      %p104 = scmp.ne.s32.totalorder %s93, %s94
      %p105 = scmp.eq.s32.totalorder %s17, 0
      %p106 = por %p104, %p105
      %p107 = scmp.ne.s32.totalorder %s93, %s94
      %p108 = scmp.eq.s32.totalorder %s18, 1
      %p109 = por %p107, %p108
      %p111 = scmp.ne.s32.totalorder %s94, %s110
      %p112 = scmp.eq.s32.totalorder %s18, 0
      %p113 = por %p111, %p112
      %p114 = scmp.le.s32.totalorder 1, %s12
      %p115 = scmp.lt.s32.totalorder %s12, 3
      %p116 = pnand %p114, %p115
      %p117 = pneg %p116
      // Predicated region
      $region9: #{tpu_custom_call.1} parent=5 // pred_check
        _
      $region10: #{tpu_custom_call.1} parent=5 // pred_check_branch
        %119 = sbr.rel (%p116) target = $region12
      $region11: #{tpu_custom_call.1} parent=5 // pred_region
        %s120 = ssub.s32 %s12, 1
        // Predicated region
        $region13: #{tpu_custom_call.1} parent=11 // pred_check
          %p121 = pneg %p59
        $region14: #{tpu_custom_call.1} parent=11 // pred_check_branch
          %123 = sbr.rel (%p121) target = $region16
        $region15: #{tpu_custom_call.1} parent=11 // pred_region
          _
        $region16: #{tpu_custom_call.1} parent=11 // pred_fallthru
          _
        // Predicated region
        $region17: #{tpu_custom_call.1} parent=11 // pred_check
          %p124 = pneg %p80
        $region18: #{tpu_custom_call.1} parent=11 // pred_check_branch
          %126 = sbr.rel (%p124) target = $region20
        $region19: #{tpu_custom_call.1} parent=11 // pred_region
          _
        $region20: #{tpu_custom_call.1} parent=11 // pred_fallthru
          _
      $region12: #{tpu_custom_call.1} parent=5 // pred_fallthru
        _
      %p127 = scmp.lt.s32.totalorder %s12, 2
      // Predicated region
      $region21: #{tpu_custom_call.1} parent=5 // pred_check
        %p128 = pneg %p127
      $region22: #{tpu_custom_call.1} parent=5 // pred_check_branch
        %130 = sbr.rel (%p128) target = $region24
      $region23: #{tpu_custom_call.1} parent=5 // pred_region
        // Predicated region
        $region25: #{tpu_custom_call.1} parent=23 // pred_check
          %p131 = pneg %p32
        $region26: #{tpu_custom_call.1} parent=23 // pred_check_branch
          %133 = sbr.rel (%p131) target = $region28
        $region27: #{tpu_custom_call.1} parent=23 // pred_region
          %s134 = smul.u32 8, %s12
          %p135 = scmp.lt.s32.totalorder %s134, 15
          %s136 = scalar_select %p135, %s134, 15
          %s137 = smul.addr %s136, 4
          %s138 = scalar_lea.vmem %s0, %s137
          %s139 = smul.u32 8, %s12
        $region28: #{tpu_custom_call.1} parent=23 // pred_fallthru
          _
      $region24: #{tpu_custom_call.1} parent=5 // pred_fallthru
        _
      %p140 = scmp.le.s32.totalorder 1, %s12
      %p141 = scmp.lt.s32.totalorder %s12, 3
      %p142 = pnand %p140, %p141
      %p143 = pneg %p142
      // Predicated region
      $region29: #{tpu_custom_call.1} parent=5 // pred_check
        _
      $region30: #{tpu_custom_call.1} parent=5 // pred_check_branch
        %145 = sbr.rel (%p142) target = $region32
      $region31: #{tpu_custom_call.1} parent=5 // pred_region
        %s146 = ssub.s32 %s12, 1
        %s147 = smul.u32 8, %s17
        %p148 = scmp.lt.s32.totalorder %s147, 15
        %s149 = scalar_select %p148, %s147, 15
        %s150 = smul.addr %s149, 4
        %s151 = scalar_lea.vmem %s0, %s150
        %p152 = pneg %p38
        %p153 = pneg %p35
        %p154 = pneg %p59
        %p155 = pneg %p56
        %p156 = pneg %p80
        %p157 = pneg %p77
        %p158 = pneg %p106
        %p159 = pneg %p103
        %s160 = sand.u32 %s93, 1
        %s161 = scalar_lea.sflag [#allocation3], %s160
        %s162 = sand.u32 %s93, 1
        %s163 = smul.addr %s162, 64
        %s164 = scalar_lea.vmem [#allocation2], %s163
        %s165 = smul.u32 8, %s17
        %p166 = scmp.lt.s32.totalorder %s165, 15
        %s167 = scalar_select %p166, %s165, 15
        %s168 = smul.addr %s167, 4
        %s169 = scalar_lea.vmem %s0, %s168
        %s170 = smul.u32 8, %s17
        %s171 = smul.u32 8, %s17
        %v173 = vld [vmem:[%s169] sm:$0xf]
        %v174 = vld [vmem:[%s169 + $0x4] sm:$0xf]
        %v175 = vld [vmem:[%s169 + $0x8] sm:$0xf]
        %v176 = vld [vmem:[%s169 + $0xc] sm:$0xf]
        %v177 = vld [vmem:[%s169 + $0x10] sm:$0xf]
        %v178 = vld [vmem:[%s169 + $0x14] sm:$0xf]
        %v179 = vld [vmem:[%s169 + $0x18] sm:$0xf]
        %v180 = vld [vmem:[%s169 + $0x1c] sm:$0xf]
        %v181 = vld [vmem:[%s1] sm:$0xf]
        %v182 = vld [vmem:[%s1 + $0x4] sm:$0xf]
        %v183 = vld [vmem:[%s1 + $0x8] sm:$0xf]
        %v184 = vld [vmem:[%s1 + $0xc] sm:$0xf]
        %v185 = vld [vmem:[%s1 + $0x10] sm:$0xf]
        %v186 = vld [vmem:[%s1 + $0x14] sm:$0xf]
        %v187 = vld [vmem:[%s1 + $0x18] sm:$0xf]
        %v188 = vld [vmem:[%s1 + $0x1c] sm:$0xf]
        %v189 = vld [vmem:[%s1 + $0x20] sm:$0xf]
        %v190 = vld [vmem:[%s1 + $0x24] sm:$0xf]
        %v191 = vld [vmem:[%s1 + $0x28] sm:$0xf]
        %v192 = vld [vmem:[%s1 + $0x2c] sm:$0xf]
        %v193 = vld [vmem:[%s1 + $0x30] sm:$0xf]
        %v194 = vld [vmem:[%s1 + $0x34] sm:$0xf]
        %v195 = vld [vmem:[%s1 + $0x38] sm:$0xf]
        %v196 = vld [vmem:[%s1 + $0x3c] sm:$0xf]
        %v205 = vunpack.c.l.b16 %v173
        %v206 = vunpack.c.l.b16 %v174
        %v207 = vunpack.c.l.b16 %v175
        %v208 = vunpack.c.l.b16 %v176
        %v209 = vunpack.c.l.b16 %v177
        %v210 = vunpack.c.l.b16 %v178
        %v211 = vunpack.c.l.b16 %v179
        %v212 = vunpack.c.l.b16 %v180
        %v213 = vpack.c.b16 %v206, %v205
        %v214 = vpack.c.b16 %v208, %v207
        %v215 = vpack.c.b16 %v210, %v209
        %v216 = vpack.c.b16 %v212, %v211
        %v237 = vunpack.c.l.b16 %v181
        %v238 = vunpack.c.l.b16 %v182
        %v239 = vunpack.c.l.b16 %v183
        %v240 = vunpack.c.l.b16 %v184
        %v241 = vunpack.c.l.b16 %v185
        %v242 = vunpack.c.l.b16 %v186
        %v243 = vunpack.c.l.b16 %v187
        %v244 = vunpack.c.l.b16 %v188
        %v245 = vunpack.c.l.b16 %v189
        %v246 = vunpack.c.l.b16 %v190
        %v247 = vunpack.c.l.b16 %v191
        %v248 = vunpack.c.l.b16 %v192
        %v249 = vunpack.c.l.b16 %v193
        %v250 = vunpack.c.l.b16 %v194
        %v251 = vunpack.c.l.b16 %v195
        %v252 = vunpack.c.l.b16 %v196
        %v253 = vpack.c.b16 %v238, %v237
        %v254 = vpack.c.b16 %v240, %v239
        %v255 = vpack.c.b16 %v242, %v241
        %v256 = vpack.c.b16 %v244, %v243
        %v257 = vpack.c.b16 %v246, %v245
        %v258 = vpack.c.b16 %v248, %v247
        %v259 = vpack.c.b16 %v250, %v249
        %v260 = vpack.c.b16 %v252, %v251
        %269 = vmatprep.subr.bf16.mxu0 0
        %270 = vmatpush1.bf16.msra.mxu0 %v253
        %271 = vmatprep.subr.bf16.mxu0 0
        %272 = vmatpush1.bf16.msra.mxu0 %v254
        %273 = vmatprep.subr.bf16.mxu0 0
        %274 = vmatpush1.bf16.msra.mxu0 %v255
        %275 = vmatprep.subr.bf16.mxu0 0
        %276 = vmatpush1.bf16.msra.mxu0 %v256
        %277 = vmatprep.subr.bf16.mxu0 0
        %278 = vmatpush1.bf16.msra.mxu0 %v257
        %279 = vmatprep.subr.bf16.mxu0 0
        %280 = vmatpush1.bf16.msra.mxu0 %v258
        %281 = vmatprep.subr.bf16.mxu0 0
        %282 = vmatpush1.bf16.msra.mxu0 %v259
        %283 = vmatprep.subr.bf16.mxu0 0
        %284 = vmatpush1.bf16.msra.mxu0 %v260
        %285 = vmatprep.subr.bf16.mxu0 0
        %286 = vmatpush1.bf16.msra.mxu0 0
        %287 = vmatprep.subr.bf16.mxu0 0
        %288 = vmatpush1.bf16.msra.mxu0 0
        %289 = vmatprep.subr.bf16.mxu0 0
        %290 = vmatpush1.bf16.msra.mxu0 0
        %291 = vmatprep.subr.bf16.mxu0 0
        %292 = vmatpush1.bf16.msra.mxu0 0
        %293 = vmatprep.subr.bf16.mxu0 0
        %294 = vmatpush1.bf16.msra.mxu0 0
        %295 = vmatprep.subr.bf16.mxu0 0
        %296 = vmatpush1.bf16.msra.mxu0 0
        %297 = vmatprep.subr.bf16.mxu0 0
        %298 = vmatpush1.bf16.msra.mxu0 0
        %299 = vmatprep.subr.bf16.mxu0 0
        %300 = vmatpush1.bf16.msra.mxu0 0
        %301 = vmatprep.mubr.bf16.mxu0 0
        %302 = vmatmul.mubr.bf16.gmra.mrb[0].mxu0 %v213
        %v303 = vpop.f32.mrb[0].mxu0
        %v304 = vadd.f32 0.0, %v303
        %v305 = vpop.f32.mrb[0].mxu0
        %v306 = vpop.f32.mrb[0].mxu0
        %v307 = vadd.f32 0.0, %v306
        %v308 = vpop.f32.mrb[0].mxu0
        %309 = vmatprep.mubr.bf16.mxu0 0
        %310 = vmatmul.mubr.bf16.gmra.mrb[0].mxu0 %v214
        %v311 = vpop.f32.mrb[0].mxu0
        %v312 = vadd.f32 0.0, %v311
        %v313 = vpop.f32.mrb[0].mxu0
        %v314 = vpop.f32.mrb[0].mxu0
        %v315 = vadd.f32 0.0, %v314
        %v316 = vpop.f32.mrb[0].mxu0
        %317 = vmatprep.mubr.bf16.mxu0 0
        %318 = vmatmul.mubr.bf16.gmra.mrb[0].mxu0 %v215
        %v319 = vpop.f32.mrb[0].mxu0
        %v320 = vadd.f32 0.0, %v319
        %v321 = vpop.f32.mrb[0].mxu0
        %v322 = vpop.f32.mrb[0].mxu0
        %v323 = vadd.f32 0.0, %v322
        %v324 = vpop.f32.mrb[0].mxu0
        %325 = vmatprep.mubr.bf16.mxu0 0
        %326 = vmatmul.mubr.bf16.gmra.mrb[0].mxu0 %v216
        %v327 = vpop.f32.mrb[0].mxu0
        %v328 = vadd.f32 0.0, %v327
        %v329 = vpop.f32.mrb[0].mxu0
        %v330 = vpop.f32.mrb[0].mxu0
        %v331 = vadd.f32 0.0, %v330
        %v332 = vpop.f32.mrb[0].mxu0
        %333 = vdwg.mxu0
        %v334 = vld [vmem:[%s2] sm:$0xff]
        %vm335 = vcmask 64512
        %v337 = vsel %vm335, %v304, 0
        %v340 = vsel %vm335, %v307, 0
        %v343 = vsel %vm335, %v312, 0
        %v346 = vsel %vm335, %v315, 0
        %v349 = vsel %vm335, %v320, 0
        %v352 = vsel %vm335, %v323, 0
        %v355 = vsel %vm335, %v328, 0
        %v358 = vsel %vm335, %v331, 0
        %360 = vmatprep.subr.mxu0 0.0
        %v361 = vand.u32 %v334, 4294901760
        %362 = vmatpush1.msra.mxu0 %v361
        %363 = vmatprep.subr.mxu0 0.0
        %364 = vmatpush1.msra.mxu0 0.0
        %365 = vmatprep.subr.mxu0 0.0
        %366 = vmatpush1.msra.mxu0 0.0
        %367 = vmatprep.subr.mxu0 0.0
        %368 = vmatpush1.msra.mxu0 0.0
        %369 = vmatprep.subr.mxu0 0.0
        %370 = vmatpush1.msra.mxu0 0.0
        %371 = vmatprep.subr.mxu0 0.0
        %372 = vmatpush1.msra.mxu0 0.0
        %373 = vmatprep.subr.mxu0 0.0
        %374 = vmatpush1.msra.mxu0 0.0
        %375 = vmatprep.subr.mxu0 0.0
        %376 = vmatpush1.msra.mxu0 0.0
        %377 = vmatprep.subr.mxu0 0.0
        %378 = vmatpush1.msra.mxu0 0.0
        %379 = vmatprep.subr.mxu0 0.0
        %380 = vmatpush1.msra.mxu0 0.0
        %381 = vmatprep.subr.mxu0 0.0
        %382 = vmatpush1.msra.mxu0 0.0
        %383 = vmatprep.subr.mxu0 0.0
        %384 = vmatpush1.msra.mxu0 0.0
        %385 = vmatprep.subr.mxu0 0.0
        %386 = vmatpush1.msra.mxu0 0.0
        %387 = vmatprep.subr.mxu0 0.0
        %388 = vmatpush1.msra.mxu0 0.0
        %389 = vmatprep.subr.mxu0 0.0
        %390 = vmatpush1.msra.mxu0 0.0
        %391 = vmatprep.subr.mxu0 0.0
        %392 = vmatpush1.msra.mxu0 0.0
        %393 = vmatprep.subr.mxu0 0.0
        %394 = vmatpush1.msra.mxu0 0.0
        %395 = vmatprep.subr.mxu0 0.0
        %396 = vmatpush1.msra.mxu0 0.0
        %397 = vmatprep.subr.mxu0 0.0
        %398 = vmatpush1.msra.mxu0 0.0
        %399 = vmatprep.subr.mxu0 0.0
        %400 = vmatpush1.msra.mxu0 0.0
        %401 = vmatprep.subr.mxu0 0.0
        %402 = vmatpush1.msra.mxu0 0.0
        %403 = vmatprep.subr.mxu0 0.0
        %404 = vmatpush1.msra.mxu0 0.0
        %405 = vmatprep.subr.mxu0 0.0
        %406 = vmatpush1.msra.mxu0 0.0
        %407 = vmatprep.subr.mxu0 0.0
        %408 = vmatpush1.msra.mxu0 0.0
        %409 = vmatprep.subr.mxu0 0.0
        %410 = vmatpush1.msra.mxu0 0.0
        %411 = vmatprep.subr.mxu0 0.0
        %412 = vmatpush1.msra.mxu0 0.0
        %413 = vmatprep.subr.mxu0 0.0
        %414 = vmatpush1.msra.mxu0 0.0
        %415 = vmatprep.subr.mxu0 0.0
        %416 = vmatpush1.msra.mxu0 0.0
        %417 = vmatprep.subr.mxu0 0.0
        %418 = vmatpush1.msra.mxu0 0.0
        %419 = vmatprep.subr.mxu0 0.0
        %420 = vmatpush1.msra.mxu0 0.0
        %421 = vmatprep.subr.mxu0 0.0
        %422 = vmatpush1.msra.mxu0 0.0
        %423 = vmatprep.subr.mxu0 0.0
        %424 = vmatpush1.msra.mxu0 0.0
        %425 = vmatprep.mubr.f32.mxu0 0.0
        %v426 = vand.u32 %v337, 4294901760
        %v427 = vsub.f32 %v337, %v426
        %v428 = vand.u32 %v427, 4294901760
        %v429 = vsub.f32 %v427, %v428
        %v430 = vand.u32 %v429, 4294901760
        %431 = vmatmul.mubr.f32.gmra.mrb[0].mxu0 %v430
        %v432 = vpop.f32.mrb[0].mxu0
        %v433 = vadd.f32 0.0, %v432
        %v434 = vpop.f32.mrb[0].mxu0
        %435 = vmatprep.mubr.f32.mxu0 0.0
        %v436 = vand.u32 %v340, 4294901760
        %v437 = vsub.f32 %v340, %v436
        %v438 = vand.u32 %v437, 4294901760
        %v439 = vsub.f32 %v437, %v438
        %v440 = vand.u32 %v439, 4294901760
        %441 = vmatmul.mubr.f32.gmra.mrb[0].mxu0 %v440
        %v442 = vpop.f32.mrb[0].mxu0
        %v443 = vadd.f32 0.0, %v442
        %v444 = vpop.f32.mrb[0].mxu0
        %445 = vmatprep.mubr.f32.mxu0 0.0
        %v446 = vand.u32 %v343, 4294901760
        %v447 = vsub.f32 %v343, %v446
        %v448 = vand.u32 %v447, 4294901760
        %v449 = vsub.f32 %v447, %v448
        %v450 = vand.u32 %v449, 4294901760
        %451 = vmatmul.mubr.f32.gmra.mrb[0].mxu0 %v450
        %v452 = vpop.f32.mrb[0].mxu0
        %v453 = vadd.f32 0.0, %v452
        %v454 = vpop.f32.mrb[0].mxu0
        %455 = vmatprep.mubr.f32.mxu0 0.0
        %v456 = vand.u32 %v346, 4294901760
        %v457 = vsub.f32 %v346, %v456
        %v458 = vand.u32 %v457, 4294901760
        %v459 = vsub.f32 %v457, %v458
        %v460 = vand.u32 %v459, 4294901760
        %461 = vmatmul.mubr.f32.gmra.mrb[0].mxu0 %v460
        %v462 = vpop.f32.mrb[0].mxu0
        %v463 = vadd.f32 0.0, %v462
        %v464 = vpop.f32.mrb[0].mxu0
        %465 = vmatprep.mubr.f32.mxu0 0.0
        %v466 = vand.u32 %v349, 4294901760
        %v467 = vsub.f32 %v349, %v466
        %v468 = vand.u32 %v467, 4294901760
        %v469 = vsub.f32 %v467, %v468
        %v470 = vand.u32 %v469, 4294901760
        %471 = vmatmul.mubr.f32.gmra.mrb[0].mxu0 %v470
        %v472 = vpop.f32.mrb[0].mxu0
        %v473 = vadd.f32 0.0, %v472
        %v474 = vpop.f32.mrb[0].mxu0
        %475 = vmatprep.mubr.f32.mxu0 0.0
        %v476 = vand.u32 %v352, 4294901760
        %v477 = vsub.f32 %v352, %v476
        %v478 = vand.u32 %v477, 4294901760
        %v479 = vsub.f32 %v477, %v478
        %v480 = vand.u32 %v479, 4294901760
        %481 = vmatmul.mubr.f32.gmra.mrb[0].mxu0 %v480
        %v482 = vpop.f32.mrb[0].mxu0
        %v483 = vadd.f32 0.0, %v482
        %v484 = vpop.f32.mrb[0].mxu0
        %485 = vmatprep.mubr.f32.mxu0 0.0
        %v486 = vand.u32 %v355, 4294901760
        %v487 = vsub.f32 %v355, %v486
        %v488 = vand.u32 %v487, 4294901760
        %v489 = vsub.f32 %v487, %v488
        %v490 = vand.u32 %v489, 4294901760
        %491 = vmatmul.mubr.f32.gmra.mrb[0].mxu0 %v490
        %v492 = vpop.f32.mrb[0].mxu0
        %v493 = vadd.f32 0.0, %v492
        %v494 = vpop.f32.mrb[0].mxu0
        %495 = vmatprep.mubr.f32.mxu0 0.0
        %v496 = vand.u32 %v358, 4294901760
        %v497 = vsub.f32 %v358, %v496
        %v498 = vand.u32 %v497, 4294901760
        %v499 = vsub.f32 %v497, %v498
        %v500 = vand.u32 %v499, 4294901760
        %501 = vmatmul.mubr.f32.gmra.mrb[0].mxu0 %v500
        %v502 = vpop.f32.mrb[0].mxu0
        %v503 = vadd.f32 0.0, %v502
        %v504 = vpop.f32.mrb[0].mxu0
        %505 = vdwg.mxu0
        %506 = vmatprep.subr.mxu0 0.0
        %v507 = vand.u32 %v334, 4294901760
        %v508 = vsub.f32 %v334, %v507
        %v509 = vand.u32 %v508, 4294901760
        %v510 = vsub.f32 %v508, %v509
        %v511 = vand.u32 %v510, 4294901760
        %512 = vmatpush1.msra.mxu0 %v511
        %513 = vmatprep.subr.mxu0 0.0
        %514 = vmatpush1.msra.mxu0 0.0
        %515 = vmatprep.subr.mxu0 0.0
        %516 = vmatpush1.msra.mxu0 0.0
        %517 = vmatprep.subr.mxu0 0.0
        %518 = vmatpush1.msra.mxu0 0.0
        %519 = vmatprep.subr.mxu0 0.0
        %520 = vmatpush1.msra.mxu0 0.0
        %521 = vmatprep.subr.mxu0 0.0
        %522 = vmatpush1.msra.mxu0 0.0
        %523 = vmatprep.subr.mxu0 0.0
        %524 = vmatpush1.msra.mxu0 0.0
        %525 = vmatprep.subr.mxu0 0.0
        %526 = vmatpush1.msra.mxu0 0.0
        %527 = vmatprep.subr.mxu0 0.0
        %528 = vmatpush1.msra.mxu0 0.0
        %529 = vmatprep.subr.mxu0 0.0
        %530 = vmatpush1.msra.mxu0 0.0
        %531 = vmatprep.subr.mxu0 0.0
        %532 = vmatpush1.msra.mxu0 0.0
        %533 = vmatprep.subr.mxu0 0.0
        %534 = vmatpush1.msra.mxu0 0.0
        %535 = vmatprep.subr.mxu0 0.0
        %536 = vmatpush1.msra.mxu0 0.0
        %537 = vmatprep.subr.mxu0 0.0
        %538 = vmatpush1.msra.mxu0 0.0
        %539 = vmatprep.subr.mxu0 0.0
        %540 = vmatpush1.msra.mxu0 0.0
        %541 = vmatprep.subr.mxu0 0.0
        %542 = vmatpush1.msra.mxu0 0.0
        %543 = vmatprep.subr.mxu0 0.0
        %544 = vmatpush1.msra.mxu0 0.0
        %545 = vmatprep.subr.mxu0 0.0
        %546 = vmatpush1.msra.mxu0 0.0
        %547 = vmatprep.subr.mxu0 0.0
        %548 = vmatpush1.msra.mxu0 0.0
        %549 = vmatprep.subr.mxu0 0.0
        %550 = vmatpush1.msra.mxu0 0.0
        %551 = vmatprep.subr.mxu0 0.0
        %552 = vmatpush1.msra.mxu0 0.0
        %553 = vmatprep.subr.mxu0 0.0
        %554 = vmatpush1.msra.mxu0 0.0
        %555 = vmatprep.subr.mxu0 0.0
        %556 = vmatpush1.msra.mxu0 0.0
        %557 = vmatprep.subr.mxu0 0.0
        %558 = vmatpush1.msra.mxu0 0.0
        %559 = vmatprep.subr.mxu0 0.0
        %560 = vmatpush1.msra.mxu0 0.0
        %561 = vmatprep.subr.mxu0 0.0
        %562 = vmatpush1.msra.mxu0 0.0
        %563 = vmatprep.subr.mxu0 0.0
        %564 = vmatpush1.msra.mxu0 0.0
        %565 = vmatprep.subr.mxu0 0.0
        %566 = vmatpush1.msra.mxu0 0.0
        %567 = vmatprep.subr.mxu0 0.0
        %568 = vmatpush1.msra.mxu0 0.0
        %569 = vmatprep.subr.mxu0 0.0
        %570 = vmatpush1.msra.mxu0 0.0
        %571 = vmatprep.subr.mxu0 0.0
        %572 = vmatpush1.msra.mxu0 0.0
        %573 = vmatprep.subr.mxu0 0.0
        %574 = vmatpush1.msra.mxu0 0.0
        %575 = vmatprep.mubr.f32.mxu0 0.0
        %v576 = vand.u32 %v337, 4294901760
        %577 = vmatmul.mubr.f32.gmra.mrb[0].mxu0 %v576
        %v578 = vpop.f32.mrb[0].mxu0
        %v579 = vadd.f32 %v433, %v578
        %v580 = vpop.f32.mrb[0].mxu0
        %581 = vmatprep.mubr.f32.mxu0 0.0
        %v582 = vand.u32 %v340, 4294901760
        %583 = vmatmul.mubr.f32.gmra.mrb[0].mxu0 %v582
        %v584 = vpop.f32.mrb[0].mxu0
        %v585 = vadd.f32 %v443, %v584
        %v586 = vpop.f32.mrb[0].mxu0
        %587 = vmatprep.mubr.f32.mxu0 0.0
        %v588 = vand.u32 %v343, 4294901760
        %589 = vmatmul.mubr.f32.gmra.mrb[0].mxu0 %v588
        %v590 = vpop.f32.mrb[0].mxu0
        %v591 = vadd.f32 %v453, %v590
        %v592 = vpop.f32.mrb[0].mxu0
        %593 = vmatprep.mubr.f32.mxu0 0.0
        %v594 = vand.u32 %v346, 4294901760
        %595 = vmatmul.mubr.f32.gmra.mrb[0].mxu0 %v594
        %v596 = vpop.f32.mrb[0].mxu0
        %v597 = vadd.f32 %v463, %v596
        %v598 = vpop.f32.mrb[0].mxu0
        %599 = vmatprep.mubr.f32.mxu0 0.0
        %v600 = vand.u32 %v349, 4294901760
        %601 = vmatmul.mubr.f32.gmra.mrb[0].mxu0 %v600
        %v602 = vpop.f32.mrb[0].mxu0
        %v603 = vadd.f32 %v473, %v602
        %v604 = vpop.f32.mrb[0].mxu0
        %605 = vmatprep.mubr.f32.mxu0 0.0
        %v606 = vand.u32 %v352, 4294901760
        %607 = vmatmul.mubr.f32.gmra.mrb[0].mxu0 %v606
        %v608 = vpop.f32.mrb[0].mxu0
        %v609 = vadd.f32 %v483, %v608
        %v610 = vpop.f32.mrb[0].mxu0
        %611 = vmatprep.mubr.f32.mxu0 0.0
        %v612 = vand.u32 %v355, 4294901760
        %613 = vmatmul.mubr.f32.gmra.mrb[0].mxu0 %v612
        %v614 = vpop.f32.mrb[0].mxu0
        %v615 = vadd.f32 %v493, %v614
        %v616 = vpop.f32.mrb[0].mxu0
        %617 = vmatprep.mubr.f32.mxu0 0.0
        %v618 = vand.u32 %v358, 4294901760
        %619 = vmatmul.mubr.f32.gmra.mrb[0].mxu0 %v618
        %v620 = vpop.f32.mrb[0].mxu0
        %v621 = vadd.f32 %v503, %v620
        %v622 = vpop.f32.mrb[0].mxu0
        %623 = vdwg.mxu0
        %624 = vmatprep.subr.mxu0 0.0
        %v625 = vand.u32 %v334, 4294901760
        %v626 = vsub.f32 %v334, %v625
        %627 = vmatpush1.msra.mxu0 %v626
        %628 = vmatprep.subr.mxu0 0.0
        %629 = vmatpush1.msra.mxu0 0.0
        %630 = vmatprep.subr.mxu0 0.0
        %631 = vmatpush1.msra.mxu0 0.0
        %632 = vmatprep.subr.mxu0 0.0
        %633 = vmatpush1.msra.mxu0 0.0
        %634 = vmatprep.subr.mxu0 0.0
        %635 = vmatpush1.msra.mxu0 0.0
        %636 = vmatprep.subr.mxu0 0.0
        %637 = vmatpush1.msra.mxu0 0.0
        %638 = vmatprep.subr.mxu0 0.0
        %639 = vmatpush1.msra.mxu0 0.0
        %640 = vmatprep.subr.mxu0 0.0
        %641 = vmatpush1.msra.mxu0 0.0
        %642 = vmatprep.subr.mxu0 0.0
        %643 = vmatpush1.msra.mxu0 0.0
        %644 = vmatprep.subr.mxu0 0.0
        %645 = vmatpush1.msra.mxu0 0.0
        %646 = vmatprep.subr.mxu0 0.0
        %647 = vmatpush1.msra.mxu0 0.0
        %648 = vmatprep.subr.mxu0 0.0
        %649 = vmatpush1.msra.mxu0 0.0
        %650 = vmatprep.subr.mxu0 0.0
        %651 = vmatpush1.msra.mxu0 0.0
        %652 = vmatprep.subr.mxu0 0.0
        %653 = vmatpush1.msra.mxu0 0.0
        %654 = vmatprep.subr.mxu0 0.0
        %655 = vmatpush1.msra.mxu0 0.0
        %656 = vmatprep.subr.mxu0 0.0
        %657 = vmatpush1.msra.mxu0 0.0
        %658 = vmatprep.subr.mxu0 0.0
        %659 = vmatpush1.msra.mxu0 0.0
        %660 = vmatprep.subr.mxu0 0.0
        %661 = vmatpush1.msra.mxu0 0.0
        %662 = vmatprep.subr.mxu0 0.0
        %663 = vmatpush1.msra.mxu0 0.0
        %664 = vmatprep.subr.mxu0 0.0
        %665 = vmatpush1.msra.mxu0 0.0
        %666 = vmatprep.subr.mxu0 0.0
        %667 = vmatpush1.msra.mxu0 0.0
        %668 = vmatprep.subr.mxu0 0.0
        %669 = vmatpush1.msra.mxu0 0.0
        %670 = vmatprep.subr.mxu0 0.0
        %671 = vmatpush1.msra.mxu0 0.0
        %672 = vmatprep.subr.mxu0 0.0
        %673 = vmatpush1.msra.mxu0 0.0
        %674 = vmatprep.subr.mxu0 0.0
        %675 = vmatpush1.msra.mxu0 0.0
        %676 = vmatprep.subr.mxu0 0.0
        %677 = vmatpush1.msra.mxu0 0.0
        %678 = vmatprep.subr.mxu0 0.0
        %679 = vmatpush1.msra.mxu0 0.0
        %680 = vmatprep.subr.mxu0 0.0
        %681 = vmatpush1.msra.mxu0 0.0
        %682 = vmatprep.subr.mxu0 0.0
        %683 = vmatpush1.msra.mxu0 0.0
        %684 = vmatprep.subr.mxu0 0.0
        %685 = vmatpush1.msra.mxu0 0.0
        %686 = vmatprep.subr.mxu0 0.0
        %687 = vmatpush1.msra.mxu0 0.0
        %688 = vmatprep.subr.mxu0 0.0
        %689 = vmatpush1.msra.mxu0 0.0
        %690 = vmatprep.mubr.f32.mxu0 0.0
        %v691 = vand.u32 %v337, 4294901760
        %v692 = vsub.f32 %v337, %v691
        %693 = vmatmul.mubr.f32.gmra.mrb[0].mxu0 %v692
        %v694 = vpop.f32.mrb[0].mxu0
        %v695 = vadd.f32 %v579, %v694
        %v696 = vpop.f32.mrb[0].mxu0
        %697 = vmatprep.mubr.f32.mxu0 0.0
        %v698 = vand.u32 %v340, 4294901760
        %v699 = vsub.f32 %v340, %v698
        %700 = vmatmul.mubr.f32.gmra.mrb[0].mxu0 %v699
        %v701 = vpop.f32.mrb[0].mxu0
        %v702 = vadd.f32 %v585, %v701
        %v703 = vpop.f32.mrb[0].mxu0
        %704 = vmatprep.mubr.f32.mxu0 0.0
        %v705 = vand.u32 %v343, 4294901760
        %v706 = vsub.f32 %v343, %v705
        %707 = vmatmul.mubr.f32.gmra.mrb[0].mxu0 %v706
        %v708 = vpop.f32.mrb[0].mxu0
        %v709 = vadd.f32 %v591, %v708
        %v710 = vpop.f32.mrb[0].mxu0
        %711 = vmatprep.mubr.f32.mxu0 0.0
        %v712 = vand.u32 %v346, 4294901760
        %v713 = vsub.f32 %v346, %v712
        %714 = vmatmul.mubr.f32.gmra.mrb[0].mxu0 %v713
        %v715 = vpop.f32.mrb[0].mxu0
        %v716 = vadd.f32 %v597, %v715
        %v717 = vpop.f32.mrb[0].mxu0
        %718 = vmatprep.mubr.f32.mxu0 0.0
        %v719 = vand.u32 %v349, 4294901760
        %v720 = vsub.f32 %v349, %v719
        %721 = vmatmul.mubr.f32.gmra.mrb[0].mxu0 %v720
        %v722 = vpop.f32.mrb[0].mxu0
        %v723 = vadd.f32 %v603, %v722
        %v724 = vpop.f32.mrb[0].mxu0
        %725 = vmatprep.mubr.f32.mxu0 0.0
        %v726 = vand.u32 %v352, 4294901760
        %v727 = vsub.f32 %v352, %v726
        %728 = vmatmul.mubr.f32.gmra.mrb[0].mxu0 %v727
        %v729 = vpop.f32.mrb[0].mxu0
        %v730 = vadd.f32 %v609, %v729
        %v731 = vpop.f32.mrb[0].mxu0
        %732 = vmatprep.mubr.f32.mxu0 0.0
        %v733 = vand.u32 %v355, 4294901760
        %v734 = vsub.f32 %v355, %v733
        %735 = vmatmul.mubr.f32.gmra.mrb[0].mxu0 %v734
        %v736 = vpop.f32.mrb[0].mxu0
        %v737 = vadd.f32 %v615, %v736
        %v738 = vpop.f32.mrb[0].mxu0
        %739 = vmatprep.mubr.f32.mxu0 0.0
        %v740 = vand.u32 %v358, 4294901760
        %v741 = vsub.f32 %v358, %v740
        %742 = vmatmul.mubr.f32.gmra.mrb[0].mxu0 %v741
        %v743 = vpop.f32.mrb[0].mxu0
        %v744 = vadd.f32 %v621, %v743
        %v745 = vpop.f32.mrb[0].mxu0
        %746 = vdwg.mxu0
        %747 = vmatprep.subr.mxu0 0.0
        %v748 = vand.u32 %v334, 4294901760
        %749 = vmatpush1.msra.mxu0 %v748
        %750 = vmatprep.subr.mxu0 0.0
        %751 = vmatpush1.msra.mxu0 0.0
        %752 = vmatprep.subr.mxu0 0.0
        %753 = vmatpush1.msra.mxu0 0.0
        %754 = vmatprep.subr.mxu0 0.0
        %755 = vmatpush1.msra.mxu0 0.0
        %756 = vmatprep.subr.mxu0 0.0
        %757 = vmatpush1.msra.mxu0 0.0
        %758 = vmatprep.subr.mxu0 0.0
        %759 = vmatpush1.msra.mxu0 0.0
        %760 = vmatprep.subr.mxu0 0.0
        %761 = vmatpush1.msra.mxu0 0.0
        %762 = vmatprep.subr.mxu0 0.0
        %763 = vmatpush1.msra.mxu0 0.0
        %764 = vmatprep.subr.mxu0 0.0
        %765 = vmatpush1.msra.mxu0 0.0
        %766 = vmatprep.subr.mxu0 0.0
        %767 = vmatpush1.msra.mxu0 0.0
        %768 = vmatprep.subr.mxu0 0.0
        %769 = vmatpush1.msra.mxu0 0.0
        %770 = vmatprep.subr.mxu0 0.0
        %771 = vmatpush1.msra.mxu0 0.0
        %772 = vmatprep.subr.mxu0 0.0
        %773 = vmatpush1.msra.mxu0 0.0
        %774 = vmatprep.subr.mxu0 0.0
        %775 = vmatpush1.msra.mxu0 0.0
        %776 = vmatprep.subr.mxu0 0.0
        %777 = vmatpush1.msra.mxu0 0.0
        %778 = vmatprep.subr.mxu0 0.0
        %779 = vmatpush1.msra.mxu0 0.0
        %780 = vmatprep.subr.mxu0 0.0
        %781 = vmatpush1.msra.mxu0 0.0
        %782 = vmatprep.subr.mxu0 0.0
        %783 = vmatpush1.msra.mxu0 0.0
        %784 = vmatprep.subr.mxu0 0.0
        %785 = vmatpush1.msra.mxu0 0.0
        %786 = vmatprep.subr.mxu0 0.0
        %787 = vmatpush1.msra.mxu0 0.0
        %788 = vmatprep.subr.mxu0 0.0
        %789 = vmatpush1.msra.mxu0 0.0
        %790 = vmatprep.subr.mxu0 0.0
        %791 = vmatpush1.msra.mxu0 0.0
        %792 = vmatprep.subr.mxu0 0.0
        %793 = vmatpush1.msra.mxu0 0.0
        %794 = vmatprep.subr.mxu0 0.0
        %795 = vmatpush1.msra.mxu0 0.0
        %796 = vmatprep.subr.mxu0 0.0
        %797 = vmatpush1.msra.mxu0 0.0
        %798 = vmatprep.subr.mxu0 0.0
        %799 = vmatpush1.msra.mxu0 0.0
        %800 = vmatprep.subr.mxu0 0.0
        %801 = vmatpush1.msra.mxu0 0.0
        %802 = vmatprep.subr.mxu0 0.0
        %803 = vmatpush1.msra.mxu0 0.0
        %804 = vmatprep.subr.mxu0 0.0
        %805 = vmatpush1.msra.mxu0 0.0
        %806 = vmatprep.subr.mxu0 0.0
        %807 = vmatpush1.msra.mxu0 0.0
        %808 = vmatprep.subr.mxu0 0.0
        %809 = vmatpush1.msra.mxu0 0.0
        %810 = vmatprep.subr.mxu0 0.0
        %811 = vmatpush1.msra.mxu0 0.0
        %812 = vmatprep.mubr.f32.mxu0 0.0
        %v813 = vand.u32 %v337, 4294901760
        %v814 = vsub.f32 %v337, %v813
        %v815 = vand.u32 %v814, 4294901760
        %816 = vmatmul.mubr.f32.gmra.mrb[0].mxu0 %v815
        %v817 = vpop.f32.mrb[0].mxu0
        %v818 = vadd.f32 %v695, %v817
        %v819 = vpop.f32.mrb[0].mxu0
        %820 = vmatprep.mubr.f32.mxu0 0.0
        %v821 = vand.u32 %v340, 4294901760
        %v822 = vsub.f32 %v340, %v821
        %v823 = vand.u32 %v822, 4294901760
        %824 = vmatmul.mubr.f32.gmra.mrb[0].mxu0 %v823
        %v825 = vpop.f32.mrb[0].mxu0
        %v826 = vadd.f32 %v702, %v825
        %v827 = vpop.f32.mrb[0].mxu0
        %828 = vmatprep.mubr.f32.mxu0 0.0
        %v829 = vand.u32 %v343, 4294901760
        %v830 = vsub.f32 %v343, %v829
        %v831 = vand.u32 %v830, 4294901760
        %832 = vmatmul.mubr.f32.gmra.mrb[0].mxu0 %v831
        %v833 = vpop.f32.mrb[0].mxu0
        %v834 = vadd.f32 %v709, %v833
        %v835 = vpop.f32.mrb[0].mxu0
        %836 = vmatprep.mubr.f32.mxu0 0.0
        %v837 = vand.u32 %v346, 4294901760
        %v838 = vsub.f32 %v346, %v837
        %v839 = vand.u32 %v838, 4294901760
        %840 = vmatmul.mubr.f32.gmra.mrb[0].mxu0 %v839
        %v841 = vpop.f32.mrb[0].mxu0
        %v842 = vadd.f32 %v716, %v841
        %v843 = vpop.f32.mrb[0].mxu0
        %844 = vmatprep.mubr.f32.mxu0 0.0
        %v845 = vand.u32 %v349, 4294901760
        %v846 = vsub.f32 %v349, %v845
        %v847 = vand.u32 %v846, 4294901760
        %848 = vmatmul.mubr.f32.gmra.mrb[0].mxu0 %v847
        %v849 = vpop.f32.mrb[0].mxu0
        %v850 = vadd.f32 %v723, %v849
        %v851 = vpop.f32.mrb[0].mxu0
        %852 = vmatprep.mubr.f32.mxu0 0.0
        %v853 = vand.u32 %v352, 4294901760
        %v854 = vsub.f32 %v352, %v853
        %v855 = vand.u32 %v854, 4294901760
        %856 = vmatmul.mubr.f32.gmra.mrb[0].mxu0 %v855
        %v857 = vpop.f32.mrb[0].mxu0
        %v858 = vadd.f32 %v730, %v857
        %v859 = vpop.f32.mrb[0].mxu0
        %860 = vmatprep.mubr.f32.mxu0 0.0
        %v861 = vand.u32 %v355, 4294901760
        %v862 = vsub.f32 %v355, %v861
        %v863 = vand.u32 %v862, 4294901760
        %864 = vmatmul.mubr.f32.gmra.mrb[0].mxu0 %v863
        %v865 = vpop.f32.mrb[0].mxu0
        %v866 = vadd.f32 %v737, %v865
        %v867 = vpop.f32.mrb[0].mxu0
        %868 = vmatprep.mubr.f32.mxu0 0.0
        %v869 = vand.u32 %v358, 4294901760
        %v870 = vsub.f32 %v358, %v869
        %v871 = vand.u32 %v870, 4294901760
        %872 = vmatmul.mubr.f32.gmra.mrb[0].mxu0 %v871
        %v873 = vpop.f32.mrb[0].mxu0
        %v874 = vadd.f32 %v744, %v873
        %v875 = vpop.f32.mrb[0].mxu0
        %876 = vdwg.mxu0
        %877 = vmatprep.subr.mxu0 0.0
        %v878 = vand.u32 %v334, 4294901760
        %v879 = vsub.f32 %v334, %v878
        %v880 = vand.u32 %v879, 4294901760
        %881 = vmatpush1.msra.mxu0 %v880
        %882 = vmatprep.subr.mxu0 0.0
        %883 = vmatpush1.msra.mxu0 0.0
        %884 = vmatprep.subr.mxu0 0.0
        %885 = vmatpush1.msra.mxu0 0.0
        %886 = vmatprep.subr.mxu0 0.0
        %887 = vmatpush1.msra.mxu0 0.0
        %888 = vmatprep.subr.mxu0 0.0
        %889 = vmatpush1.msra.mxu0 0.0
        %890 = vmatprep.subr.mxu0 0.0
        %891 = vmatpush1.msra.mxu0 0.0
        %892 = vmatprep.subr.mxu0 0.0
        %893 = vmatpush1.msra.mxu0 0.0
        %894 = vmatprep.subr.mxu0 0.0
        %895 = vmatpush1.msra.mxu0 0.0
        %896 = vmatprep.subr.mxu0 0.0
        %897 = vmatpush1.msra.mxu0 0.0
        %898 = vmatprep.subr.mxu0 0.0
        %899 = vmatpush1.msra.mxu0 0.0
        %900 = vmatprep.subr.mxu0 0.0
        %901 = vmatpush1.msra.mxu0 0.0
        %902 = vmatprep.subr.mxu0 0.0
        %903 = vmatpush1.msra.mxu0 0.0
        %904 = vmatprep.subr.mxu0 0.0
        %905 = vmatpush1.msra.mxu0 0.0
        %906 = vmatprep.subr.mxu0 0.0
        %907 = vmatpush1.msra.mxu0 0.0
        %908 = vmatprep.subr.mxu0 0.0
        %909 = vmatpush1.msra.mxu0 0.0
        %910 = vmatprep.subr.mxu0 0.0
        %911 = vmatpush1.msra.mxu0 0.0
        %912 = vmatprep.subr.mxu0 0.0
        %913 = vmatpush1.msra.mxu0 0.0
        %914 = vmatprep.subr.mxu0 0.0
        %915 = vmatpush1.msra.mxu0 0.0
        %916 = vmatprep.subr.mxu0 0.0
        %917 = vmatpush1.msra.mxu0 0.0
        %918 = vmatprep.subr.mxu0 0.0
        %919 = vmatpush1.msra.mxu0 0.0
        %920 = vmatprep.subr.mxu0 0.0
        %921 = vmatpush1.msra.mxu0 0.0
        %922 = vmatprep.subr.mxu0 0.0
        %923 = vmatpush1.msra.mxu0 0.0
        %924 = vmatprep.subr.mxu0 0.0
        %925 = vmatpush1.msra.mxu0 0.0
        %926 = vmatprep.subr.mxu0 0.0
        %927 = vmatpush1.msra.mxu0 0.0
        %928 = vmatprep.subr.mxu0 0.0
        %929 = vmatpush1.msra.mxu0 0.0
        %930 = vmatprep.subr.mxu0 0.0
        %931 = vmatpush1.msra.mxu0 0.0
        %932 = vmatprep.subr.mxu0 0.0
        %933 = vmatpush1.msra.mxu0 0.0
        %934 = vmatprep.subr.mxu0 0.0
        %935 = vmatpush1.msra.mxu0 0.0
        %936 = vmatprep.subr.mxu0 0.0
        %937 = vmatpush1.msra.mxu0 0.0
        %938 = vmatprep.subr.mxu0 0.0
        %939 = vmatpush1.msra.mxu0 0.0
        %940 = vmatprep.subr.mxu0 0.0
        %941 = vmatpush1.msra.mxu0 0.0
        %942 = vmatprep.subr.mxu0 0.0
        %943 = vmatpush1.msra.mxu0 0.0
        %944 = vmatprep.mubr.f32.mxu0 0.0
        %v945 = vand.u32 %v337, 4294901760
        %946 = vmatmul.mubr.f32.gmra.mrb[0].mxu0 %v945
        %v947 = vpop.f32.mrb[0].mxu0
        %v948 = vadd.f32 %v818, %v947
        %v949 = vpop.f32.mrb[0].mxu0
        %950 = vmatprep.mubr.f32.mxu0 0.0
        %v951 = vand.u32 %v340, 4294901760
        %952 = vmatmul.mubr.f32.gmra.mrb[0].mxu0 %v951
        %v953 = vpop.f32.mrb[0].mxu0
        %v954 = vadd.f32 %v826, %v953
        %v955 = vpop.f32.mrb[0].mxu0
        %956 = vmatprep.mubr.f32.mxu0 0.0
        %v957 = vand.u32 %v343, 4294901760
        %958 = vmatmul.mubr.f32.gmra.mrb[0].mxu0 %v957
        %v959 = vpop.f32.mrb[0].mxu0
        %v960 = vadd.f32 %v834, %v959
        %v961 = vpop.f32.mrb[0].mxu0
        %962 = vmatprep.mubr.f32.mxu0 0.0
        %v963 = vand.u32 %v346, 4294901760
        %964 = vmatmul.mubr.f32.gmra.mrb[0].mxu0 %v963
        %v965 = vpop.f32.mrb[0].mxu0
        %v966 = vadd.f32 %v842, %v965
        %v967 = vpop.f32.mrb[0].mxu0
        %968 = vmatprep.mubr.f32.mxu0 0.0
        %v969 = vand.u32 %v349, 4294901760
        %970 = vmatmul.mubr.f32.gmra.mrb[0].mxu0 %v969
        %v971 = vpop.f32.mrb[0].mxu0
        %v972 = vadd.f32 %v850, %v971
        %v973 = vpop.f32.mrb[0].mxu0
        %974 = vmatprep.mubr.f32.mxu0 0.0
        %v975 = vand.u32 %v352, 4294901760
        %976 = vmatmul.mubr.f32.gmra.mrb[0].mxu0 %v975
        %v977 = vpop.f32.mrb[0].mxu0
        %v978 = vadd.f32 %v858, %v977
        %v979 = vpop.f32.mrb[0].mxu0
        %980 = vmatprep.mubr.f32.mxu0 0.0
        %v981 = vand.u32 %v355, 4294901760
        %982 = vmatmul.mubr.f32.gmra.mrb[0].mxu0 %v981
        %v983 = vpop.f32.mrb[0].mxu0
        %v984 = vadd.f32 %v866, %v983
        %v985 = vpop.f32.mrb[0].mxu0
        %986 = vmatprep.mubr.f32.mxu0 0.0
        %v987 = vand.u32 %v358, 4294901760
        %988 = vmatmul.mubr.f32.gmra.mrb[0].mxu0 %v987
        %v989 = vpop.f32.mrb[0].mxu0
        %v990 = vadd.f32 %v874, %v989
        %v991 = vpop.f32.mrb[0].mxu0
        %992 = vdwg.mxu0
        %993 = vmatprep.subr.mxu0 0.0
        %v994 = vand.u32 %v334, 4294901760
        %995 = vmatpush1.msra.mxu0 %v994
        %996 = vmatprep.subr.mxu0 0.0
        %997 = vmatpush1.msra.mxu0 0.0
        %998 = vmatprep.subr.mxu0 0.0
        %999 = vmatpush1.msra.mxu0 0.0
        %1000 = vmatprep.subr.mxu0 0.0
        %1001 = vmatpush1.msra.mxu0 0.0
        %1002 = vmatprep.subr.mxu0 0.0
        %1003 = vmatpush1.msra.mxu0 0.0
        %1004 = vmatprep.subr.mxu0 0.0
        %1005 = vmatpush1.msra.mxu0 0.0
        %1006 = vmatprep.subr.mxu0 0.0
        %1007 = vmatpush1.msra.mxu0 0.0
        %1008 = vmatprep.subr.mxu0 0.0
        %1009 = vmatpush1.msra.mxu0 0.0
        %1010 = vmatprep.subr.mxu0 0.0
        %1011 = vmatpush1.msra.mxu0 0.0
        %1012 = vmatprep.subr.mxu0 0.0
        %1013 = vmatpush1.msra.mxu0 0.0
        %1014 = vmatprep.subr.mxu0 0.0
        %1015 = vmatpush1.msra.mxu0 0.0
        %1016 = vmatprep.subr.mxu0 0.0
        %1017 = vmatpush1.msra.mxu0 0.0
        %1018 = vmatprep.subr.mxu0 0.0
        %1019 = vmatpush1.msra.mxu0 0.0
        %1020 = vmatprep.subr.mxu0 0.0
        %1021 = vmatpush1.msra.mxu0 0.0
        %1022 = vmatprep.subr.mxu0 0.0
        %1023 = vmatpush1.msra.mxu0 0.0
        %1024 = vmatprep.subr.mxu0 0.0
        %1025 = vmatpush1.msra.mxu0 0.0
        %1026 = vmatprep.subr.mxu0 0.0
        %1027 = vmatpush1.msra.mxu0 0.0
        %1028 = vmatprep.subr.mxu0 0.0
        %1029 = vmatpush1.msra.mxu0 0.0
        %1030 = vmatprep.subr.mxu0 0.0
        %1031 = vmatpush1.msra.mxu0 0.0
        %1032 = vmatprep.subr.mxu0 0.0
        %1033 = vmatpush1.msra.mxu0 0.0
        %1034 = vmatprep.subr.mxu0 0.0
        %1035 = vmatpush1.msra.mxu0 0.0
        %1036 = vmatprep.subr.mxu0 0.0
        %1037 = vmatpush1.msra.mxu0 0.0
        %1038 = vmatprep.subr.mxu0 0.0
        %1039 = vmatpush1.msra.mxu0 0.0
        %1040 = vmatprep.subr.mxu0 0.0
        %1041 = vmatpush1.msra.mxu0 0.0
        %1042 = vmatprep.subr.mxu0 0.0
        %1043 = vmatpush1.msra.mxu0 0.0
        %1044 = vmatprep.subr.mxu0 0.0
        %1045 = vmatpush1.msra.mxu0 0.0
        %1046 = vmatprep.subr.mxu0 0.0
        %1047 = vmatpush1.msra.mxu0 0.0
        %1048 = vmatprep.subr.mxu0 0.0
        %1049 = vmatpush1.msra.mxu0 0.0
        %1050 = vmatprep.subr.mxu0 0.0
        %1051 = vmatpush1.msra.mxu0 0.0
        %1052 = vmatprep.subr.mxu0 0.0
        %1053 = vmatpush1.msra.mxu0 0.0
        %1054 = vmatprep.subr.mxu0 0.0
        %1055 = vmatpush1.msra.mxu0 0.0
        %1056 = vmatprep.subr.mxu0 0.0
        %1057 = vmatpush1.msra.mxu0 0.0
        %1058 = vmatprep.mubr.f32.mxu0 0.0
        %v1059 = vand.u32 %v337, 4294901760
        %1060 = vmatmul.mubr.f32.gmra.mrb[0].mxu0 %v1059
        %v1061 = vpop.f32.mrb[0].mxu0
        %v1062 = vadd.f32 %v948, %v1061
        %v1063 = vpop.f32.mrb[0].mxu0
        %1064 = vmatprep.mubr.f32.mxu0 0.0
        %v1065 = vand.u32 %v340, 4294901760
        %1066 = vmatmul.mubr.f32.gmra.mrb[0].mxu0 %v1065
        %v1067 = vpop.f32.mrb[0].mxu0
        %v1068 = vadd.f32 %v954, %v1067
        %v1069 = vpop.f32.mrb[0].mxu0
        %1070 = vmatprep.mubr.f32.mxu0 0.0
        %v1071 = vand.u32 %v343, 4294901760
        %1072 = vmatmul.mubr.f32.gmra.mrb[0].mxu0 %v1071
        %v1073 = vpop.f32.mrb[0].mxu0
        %v1074 = vadd.f32 %v960, %v1073
        %v1075 = vpop.f32.mrb[0].mxu0
        %1076 = vmatprep.mubr.f32.mxu0 0.0
        %v1077 = vand.u32 %v346, 4294901760
        %1078 = vmatmul.mubr.f32.gmra.mrb[0].mxu0 %v1077
        %v1079 = vpop.f32.mrb[0].mxu0
        %v1080 = vadd.f32 %v966, %v1079
        %v1081 = vpop.f32.mrb[0].mxu0
        %1082 = vmatprep.mubr.f32.mxu0 0.0
        %v1083 = vand.u32 %v349, 4294901760
        %1084 = vmatmul.mubr.f32.gmra.mrb[0].mxu0 %v1083
        %v1085 = vpop.f32.mrb[0].mxu0
        %v1086 = vadd.f32 %v972, %v1085
        %v1087 = vpop.f32.mrb[0].mxu0
        %1088 = vmatprep.mubr.f32.mxu0 0.0
        %v1089 = vand.u32 %v352, 4294901760
        %1090 = vmatmul.mubr.f32.gmra.mrb[0].mxu0 %v1089
        %v1091 = vpop.f32.mrb[0].mxu0
        %v1092 = vadd.f32 %v978, %v1091
        %v1093 = vpop.f32.mrb[0].mxu0
        %1094 = vmatprep.mubr.f32.mxu0 0.0
        %v1095 = vand.u32 %v355, 4294901760
        %1096 = vmatmul.mubr.f32.gmra.mrb[0].mxu0 %v1095
        %v1097 = vpop.f32.mrb[0].mxu0
        %v1098 = vadd.f32 %v984, %v1097
        %v1099 = vpop.f32.mrb[0].mxu0
        %1100 = vmatprep.mubr.f32.mxu0 0.0
        %v1101 = vand.u32 %v358, 4294901760
        %1102 = vmatmul.mubr.f32.gmra.mrb[0].mxu0 %v1101
        %v1103 = vpop.f32.mrb[0].mxu0
        %v1104 = vadd.f32 %v990, %v1103
        %v1105 = vpop.f32.mrb[0].mxu0
        %1106 = vdwg.mxu0
        %1107 = vrot.lane.b32.xlu0 %v304, 120
        %v1108 = vpop.permute.xlu0 %1107
        %1109 = vrot.lane.b32.xlu0 %v307, 120
        %v1110 = vpop.permute.xlu0 %1109
        %1111 = vrot.lane.b32.xlu0 %v312, 120
        %v1112 = vpop.permute.xlu0 %1111
        %1113 = vrot.lane.b32.xlu0 %v315, 120
        %v1114 = vpop.permute.xlu0 %1113
        %1115 = vrot.lane.b32.xlu0 %v320, 120
        %v1116 = vpop.permute.xlu0 %1115
        %1117 = vrot.lane.b32.xlu0 %v323, 120
        %v1118 = vpop.permute.xlu0 %1117
        %1119 = vrot.lane.b32.xlu0 %v328, 120
        %v1120 = vpop.permute.xlu0 %1119
        %1121 = vrot.lane.b32.xlu0 %v331, 120
        %v1122 = vpop.permute.xlu0 %1121
        %v1123 = vsel %vm335, %v1108, 0
        %v1125 = vsel %vm335, %v1110, 0
        %v1127 = vsel %vm335, %v1112, 0
        %v1129 = vsel %vm335, %v1114, 0
        %v1131 = vsel %vm335, %v1116, 0
        %v1133 = vsel %vm335, %v1118, 0
        %v1135 = vsel %vm335, %v1120, 0
        %v1137 = vsel %vm335, %v1122, 0
        %1139 = vmatprep.subr.mxu0 0.0
        %v1140 = vand.u32 %v334, 4294901760
        %1141 = vmatpush1.msra.mxu0 %v1140
        %1142 = vmatprep.subr.mxu0 0.0
        %1143 = vmatpush1.msra.mxu0 0.0
        %1144 = vmatprep.subr.mxu0 0.0
        %1145 = vmatpush1.msra.mxu0 0.0
        %1146 = vmatprep.subr.mxu0 0.0
        %1147 = vmatpush1.msra.mxu0 0.0
        %1148 = vmatprep.subr.mxu0 0.0
        %1149 = vmatpush1.msra.mxu0 0.0
        %1150 = vmatprep.subr.mxu0 0.0
        %1151 = vmatpush1.msra.mxu0 0.0
        %1152 = vmatprep.subr.mxu0 0.0
        %1153 = vmatpush1.msra.mxu0 0.0
        %1154 = vmatprep.subr.mxu0 0.0
        %1155 = vmatpush1.msra.mxu0 0.0
        %1156 = vmatprep.subr.mxu0 0.0
        %1157 = vmatpush1.msra.mxu0 0.0
        %1158 = vmatprep.subr.mxu0 0.0
        %1159 = vmatpush1.msra.mxu0 0.0
        %1160 = vmatprep.subr.mxu0 0.0
        %1161 = vmatpush1.msra.mxu0 0.0
        %1162 = vmatprep.subr.mxu0 0.0
        %1163 = vmatpush1.msra.mxu0 0.0
        %1164 = vmatprep.subr.mxu0 0.0
        %1165 = vmatpush1.msra.mxu0 0.0
        %1166 = vmatprep.subr.mxu0 0.0
        %1167 = vmatpush1.msra.mxu0 0.0
        %1168 = vmatprep.subr.mxu0 0.0
        %1169 = vmatpush1.msra.mxu0 0.0
        %1170 = vmatprep.subr.mxu0 0.0
        %1171 = vmatpush1.msra.mxu0 0.0
        %1172 = vmatprep.subr.mxu0 0.0
        %1173 = vmatpush1.msra.mxu0 0.0
        %1174 = vmatprep.subr.mxu0 0.0
        %1175 = vmatpush1.msra.mxu0 0.0
        %1176 = vmatprep.subr.mxu0 0.0
        %1177 = vmatpush1.msra.mxu0 0.0
        %1178 = vmatprep.subr.mxu0 0.0
        %1179 = vmatpush1.msra.mxu0 0.0
        %1180 = vmatprep.subr.mxu0 0.0
        %1181 = vmatpush1.msra.mxu0 0.0
        %1182 = vmatprep.subr.mxu0 0.0
        %1183 = vmatpush1.msra.mxu0 0.0
        %1184 = vmatprep.subr.mxu0 0.0
        %1185 = vmatpush1.msra.mxu0 0.0
        %1186 = vmatprep.subr.mxu0 0.0
        %1187 = vmatpush1.msra.mxu0 0.0
        %1188 = vmatprep.subr.mxu0 0.0
        %1189 = vmatpush1.msra.mxu0 0.0
        %1190 = vmatprep.subr.mxu0 0.0
        %1191 = vmatpush1.msra.mxu0 0.0
        %1192 = vmatprep.subr.mxu0 0.0
        %1193 = vmatpush1.msra.mxu0 0.0
        %1194 = vmatprep.subr.mxu0 0.0
        %1195 = vmatpush1.msra.mxu0 0.0
        %1196 = vmatprep.subr.mxu0 0.0
        %1197 = vmatpush1.msra.mxu0 0.0
        %1198 = vmatprep.subr.mxu0 0.0
        %1199 = vmatpush1.msra.mxu0 0.0
        %1200 = vmatprep.subr.mxu0 0.0
        %1201 = vmatpush1.msra.mxu0 0.0
        %1202 = vmatprep.subr.mxu0 0.0
        %1203 = vmatpush1.msra.mxu0 0.0
        %1204 = vmatprep.mubr.f32.mxu0 0.0
        %v1205 = vand.u32 %v1123, 4294901760
        %v1206 = vsub.f32 %v1123, %v1205
        %v1207 = vand.u32 %v1206, 4294901760
        %v1208 = vsub.f32 %v1206, %v1207
        %v1209 = vand.u32 %v1208, 4294901760
        %1210 = vmatmul.mubr.f32.gmra.mrb[0].mxu0 %v1209
        %v1211 = vpop.f32.mrb[0].mxu0
        %v1212 = vadd.f32 0.0, %v1211
        %v1213 = vpop.f32.mrb[0].mxu0
        %1214 = vmatprep.mubr.f32.mxu0 0.0
        %v1215 = vand.u32 %v1125, 4294901760
        %v1216 = vsub.f32 %v1125, %v1215
        %v1217 = vand.u32 %v1216, 4294901760
        %v1218 = vsub.f32 %v1216, %v1217
        %v1219 = vand.u32 %v1218, 4294901760
        %1220 = vmatmul.mubr.f32.gmra.mrb[0].mxu0 %v1219
        %v1221 = vpop.f32.mrb[0].mxu0
        %v1222 = vadd.f32 0.0, %v1221
        %v1223 = vpop.f32.mrb[0].mxu0
        %1224 = vmatprep.mubr.f32.mxu0 0.0
        %v1225 = vand.u32 %v1127, 4294901760
        %v1226 = vsub.f32 %v1127, %v1225
        %v1227 = vand.u32 %v1226, 4294901760
        %v1228 = vsub.f32 %v1226, %v1227
        %v1229 = vand.u32 %v1228, 4294901760
        %1230 = vmatmul.mubr.f32.gmra.mrb[0].mxu0 %v1229
        %v1231 = vpop.f32.mrb[0].mxu0
        %v1232 = vadd.f32 0.0, %v1231
        %v1233 = vpop.f32.mrb[0].mxu0
        %1234 = vmatprep.mubr.f32.mxu0 0.0
        %v1235 = vand.u32 %v1129, 4294901760
        %v1236 = vsub.f32 %v1129, %v1235
        %v1237 = vand.u32 %v1236, 4294901760
        %v1238 = vsub.f32 %v1236, %v1237
        %v1239 = vand.u32 %v1238, 4294901760
        %1240 = vmatmul.mubr.f32.gmra.mrb[0].mxu0 %v1239
        %v1241 = vpop.f32.mrb[0].mxu0
        %v1242 = vadd.f32 0.0, %v1241
        %v1243 = vpop.f32.mrb[0].mxu0
        %1244 = vmatprep.mubr.f32.mxu0 0.0
        %v1245 = vand.u32 %v1131, 4294901760
        %v1246 = vsub.f32 %v1131, %v1245
        %v1247 = vand.u32 %v1246, 4294901760
        %v1248 = vsub.f32 %v1246, %v1247
        %v1249 = vand.u32 %v1248, 4294901760
        %1250 = vmatmul.mubr.f32.gmra.mrb[0].mxu0 %v1249
        %v1251 = vpop.f32.mrb[0].mxu0
        %v1252 = vadd.f32 0.0, %v1251
        %v1253 = vpop.f32.mrb[0].mxu0
        %1254 = vmatprep.mubr.f32.mxu0 0.0
        %v1255 = vand.u32 %v1133, 4294901760
        %v1256 = vsub.f32 %v1133, %v1255
        %v1257 = vand.u32 %v1256, 4294901760
        %v1258 = vsub.f32 %v1256, %v1257
        %v1259 = vand.u32 %v1258, 4294901760
        %1260 = vmatmul.mubr.f32.gmra.mrb[0].mxu0 %v1259
        %v1261 = vpop.f32.mrb[0].mxu0
        %v1262 = vadd.f32 0.0, %v1261
        %v1263 = vpop.f32.mrb[0].mxu0
        %1264 = vmatprep.mubr.f32.mxu0 0.0
        %v1265 = vand.u32 %v1135, 4294901760
        %v1266 = vsub.f32 %v1135, %v1265
        %v1267 = vand.u32 %v1266, 4294901760
        %v1268 = vsub.f32 %v1266, %v1267
        %v1269 = vand.u32 %v1268, 4294901760
        %1270 = vmatmul.mubr.f32.gmra.mrb[0].mxu0 %v1269
        %v1271 = vpop.f32.mrb[0].mxu0
        %v1272 = vadd.f32 0.0, %v1271
        %v1273 = vpop.f32.mrb[0].mxu0
        %1274 = vmatprep.mubr.f32.mxu0 0.0
        %v1275 = vand.u32 %v1137, 4294901760
        %v1276 = vsub.f32 %v1137, %v1275
        %v1277 = vand.u32 %v1276, 4294901760
        %v1278 = vsub.f32 %v1276, %v1277
        %v1279 = vand.u32 %v1278, 4294901760
        %1280 = vmatmul.mubr.f32.gmra.mrb[0].mxu0 %v1279
        %v1281 = vpop.f32.mrb[0].mxu0
        %v1282 = vadd.f32 0.0, %v1281
        %v1283 = vpop.f32.mrb[0].mxu0
        %1284 = vdwg.mxu0
        %1285 = vmatprep.subr.mxu0 0.0
        %v1286 = vand.u32 %v334, 4294901760
        %v1287 = vsub.f32 %v334, %v1286
        %v1288 = vand.u32 %v1287, 4294901760
        %v1289 = vsub.f32 %v1287, %v1288
        %v1290 = vand.u32 %v1289, 4294901760
        %1291 = vmatpush1.msra.mxu0 %v1290
        %1292 = vmatprep.subr.mxu0 0.0
        %1293 = vmatpush1.msra.mxu0 0.0
        %1294 = vmatprep.subr.mxu0 0.0
        %1295 = vmatpush1.msra.mxu0 0.0
        %1296 = vmatprep.subr.mxu0 0.0
        %1297 = vmatpush1.msra.mxu0 0.0
        %1298 = vmatprep.subr.mxu0 0.0
        %1299 = vmatpush1.msra.mxu0 0.0
        %1300 = vmatprep.subr.mxu0 0.0
        %1301 = vmatpush1.msra.mxu0 0.0
        %1302 = vmatprep.subr.mxu0 0.0
        %1303 = vmatpush1.msra.mxu0 0.0
        %1304 = vmatprep.subr.mxu0 0.0
        %1305 = vmatpush1.msra.mxu0 0.0
        %1306 = vmatprep.subr.mxu0 0.0
        %1307 = vmatpush1.msra.mxu0 0.0
        %1308 = vmatprep.subr.mxu0 0.0
        %1309 = vmatpush1.msra.mxu0 0.0
        %1310 = vmatprep.subr.mxu0 0.0
        %1311 = vmatpush1.msra.mxu0 0.0
        %1312 = vmatprep.subr.mxu0 0.0
        %1313 = vmatpush1.msra.mxu0 0.0
        %1314 = vmatprep.subr.mxu0 0.0
        %1315 = vmatpush1.msra.mxu0 0.0
        %1316 = vmatprep.subr.mxu0 0.0
        %1317 = vmatpush1.msra.mxu0 0.0
        %1318 = vmatprep.subr.mxu0 0.0
        %1319 = vmatpush1.msra.mxu0 0.0
        %1320 = vmatprep.subr.mxu0 0.0
        %1321 = vmatpush1.msra.mxu0 0.0
        %1322 = vmatprep.subr.mxu0 0.0
        %1323 = vmatpush1.msra.mxu0 0.0
        %1324 = vmatprep.subr.mxu0 0.0
        %1325 = vmatpush1.msra.mxu0 0.0
        %1326 = vmatprep.subr.mxu0 0.0
        %1327 = vmatpush1.msra.mxu0 0.0
        %1328 = vmatprep.subr.mxu0 0.0
        %1329 = vmatpush1.msra.mxu0 0.0
        %1330 = vmatprep.subr.mxu0 0.0
        %1331 = vmatpush1.msra.mxu0 0.0
        %1332 = vmatprep.subr.mxu0 0.0
        %1333 = vmatpush1.msra.mxu0 0.0
        %1334 = vmatprep.subr.mxu0 0.0
        %1335 = vmatpush1.msra.mxu0 0.0
        %1336 = vmatprep.subr.mxu0 0.0
        %1337 = vmatpush1.msra.mxu0 0.0
        %1338 = vmatprep.subr.mxu0 0.0
        %1339 = vmatpush1.msra.mxu0 0.0
        %1340 = vmatprep.subr.mxu0 0.0
        %1341 = vmatpush1.msra.mxu0 0.0
        %1342 = vmatprep.subr.mxu0 0.0
        %1343 = vmatpush1.msra.mxu0 0.0
        %1344 = vmatprep.subr.mxu0 0.0
        %1345 = vmatpush1.msra.mxu0 0.0
        %1346 = vmatprep.subr.mxu0 0.0
        %1347 = vmatpush1.msra.mxu0 0.0
        %1348 = vmatprep.subr.mxu0 0.0
        %1349 = vmatpush1.msra.mxu0 0.0
        %1350 = vmatprep.subr.mxu0 0.0
        %1351 = vmatpush1.msra.mxu0 0.0
        %1352 = vmatprep.subr.mxu0 0.0
        %1353 = vmatpush1.msra.mxu0 0.0
        %1354 = vmatprep.mubr.f32.mxu0 0.0
        %v1355 = vand.u32 %v1123, 4294901760
        %1356 = vmatmul.mubr.f32.gmra.mrb[0].mxu0 %v1355
        %v1357 = vpop.f32.mrb[0].mxu0
        %v1358 = vadd.f32 %v1212, %v1357
        %v1359 = vpop.f32.mrb[0].mxu0
        %1360 = vmatprep.mubr.f32.mxu0 0.0
        %v1361 = vand.u32 %v1125, 4294901760
        %1362 = vmatmul.mubr.f32.gmra.mrb[0].mxu0 %v1361
        %v1363 = vpop.f32.mrb[0].mxu0
        %v1364 = vadd.f32 %v1222, %v1363
        %v1365 = vpop.f32.mrb[0].mxu0
        %1366 = vmatprep.mubr.f32.mxu0 0.0
        %v1367 = vand.u32 %v1127, 4294901760
        %1368 = vmatmul.mubr.f32.gmra.mrb[0].mxu0 %v1367
        %v1369 = vpop.f32.mrb[0].mxu0
        %v1370 = vadd.f32 %v1232, %v1369
        %v1371 = vpop.f32.mrb[0].mxu0
        %1372 = vmatprep.mubr.f32.mxu0 0.0
        %v1373 = vand.u32 %v1129, 4294901760
        %1374 = vmatmul.mubr.f32.gmra.mrb[0].mxu0 %v1373
        %v1375 = vpop.f32.mrb[0].mxu0
        %v1376 = vadd.f32 %v1242, %v1375
        %v1377 = vpop.f32.mrb[0].mxu0
        %1378 = vmatprep.mubr.f32.mxu0 0.0
        %v1379 = vand.u32 %v1131, 4294901760
        %1380 = vmatmul.mubr.f32.gmra.mrb[0].mxu0 %v1379
        %v1381 = vpop.f32.mrb[0].mxu0
        %v1382 = vadd.f32 %v1252, %v1381
        %v1383 = vpop.f32.mrb[0].mxu0
        %1384 = vmatprep.mubr.f32.mxu0 0.0
        %v1385 = vand.u32 %v1133, 4294901760
        %1386 = vmatmul.mubr.f32.gmra.mrb[0].mxu0 %v1385
        %v1387 = vpop.f32.mrb[0].mxu0
        %v1388 = vadd.f32 %v1262, %v1387
        %v1389 = vpop.f32.mrb[0].mxu0
        %1390 = vmatprep.mubr.f32.mxu0 0.0
        %v1391 = vand.u32 %v1135, 4294901760
        %1392 = vmatmul.mubr.f32.gmra.mrb[0].mxu0 %v1391
        %v1393 = vpop.f32.mrb[0].mxu0
        %v1394 = vadd.f32 %v1272, %v1393
        %v1395 = vpop.f32.mrb[0].mxu0
        %1396 = vmatprep.mubr.f32.mxu0 0.0
        %v1397 = vand.u32 %v1137, 4294901760
        %1398 = vmatmul.mubr.f32.gmra.mrb[0].mxu0 %v1397
        %v1399 = vpop.f32.mrb[0].mxu0
        %v1400 = vadd.f32 %v1282, %v1399
        %v1401 = vpop.f32.mrb[0].mxu0
        %1402 = vdwg.mxu0
        %1403 = vmatprep.subr.mxu0 0.0
        %v1404 = vand.u32 %v334, 4294901760
        %v1405 = vsub.f32 %v334, %v1404
        %1406 = vmatpush1.msra.mxu0 %v1405
        %1407 = vmatprep.subr.mxu0 0.0
        %1408 = vmatpush1.msra.mxu0 0.0
        %1409 = vmatprep.subr.mxu0 0.0
        %1410 = vmatpush1.msra.mxu0 0.0
        %1411 = vmatprep.subr.mxu0 0.0
        %1412 = vmatpush1.msra.mxu0 0.0
        %1413 = vmatprep.subr.mxu0 0.0
        %1414 = vmatpush1.msra.mxu0 0.0
        %1415 = vmatprep.subr.mxu0 0.0
        %1416 = vmatpush1.msra.mxu0 0.0
        %1417 = vmatprep.subr.mxu0 0.0
        %1418 = vmatpush1.msra.mxu0 0.0
        %1419 = vmatprep.subr.mxu0 0.0
        %1420 = vmatpush1.msra.mxu0 0.0
        %1421 = vmatprep.subr.mxu0 0.0
        %1422 = vmatpush1.msra.mxu0 0.0
        %1423 = vmatprep.subr.mxu0 0.0
        %1424 = vmatpush1.msra.mxu0 0.0
        %1425 = vmatprep.subr.mxu0 0.0
        %1426 = vmatpush1.msra.mxu0 0.0
        %1427 = vmatprep.subr.mxu0 0.0
        %1428 = vmatpush1.msra.mxu0 0.0
        %1429 = vmatprep.subr.mxu0 0.0
        %1430 = vmatpush1.msra.mxu0 0.0
        %1431 = vmatprep.subr.mxu0 0.0
        %1432 = vmatpush1.msra.mxu0 0.0
        %1433 = vmatprep.subr.mxu0 0.0
        %1434 = vmatpush1.msra.mxu0 0.0
        %1435 = vmatprep.subr.mxu0 0.0
        %1436 = vmatpush1.msra.mxu0 0.0
        %1437 = vmatprep.subr.mxu0 0.0
        %1438 = vmatpush1.msra.mxu0 0.0
        %1439 = vmatprep.subr.mxu0 0.0
        %1440 = vmatpush1.msra.mxu0 0.0
        %1441 = vmatprep.subr.mxu0 0.0
        %1442 = vmatpush1.msra.mxu0 0.0
        %1443 = vmatprep.subr.mxu0 0.0
        %1444 = vmatpush1.msra.mxu0 0.0
        %1445 = vmatprep.subr.mxu0 0.0
        %1446 = vmatpush1.msra.mxu0 0.0
        %1447 = vmatprep.subr.mxu0 0.0
        %1448 = vmatpush1.msra.mxu0 0.0
        %1449 = vmatprep.subr.mxu0 0.0
        %1450 = vmatpush1.msra.mxu0 0.0
        %1451 = vmatprep.subr.mxu0 0.0
        %1452 = vmatpush1.msra.mxu0 0.0
        %1453 = vmatprep.subr.mxu0 0.0
        %1454 = vmatpush1.msra.mxu0 0.0
        %1455 = vmatprep.subr.mxu0 0.0
        %1456 = vmatpush1.msra.mxu0 0.0
        %1457 = vmatprep.subr.mxu0 0.0
        %1458 = vmatpush1.msra.mxu0 0.0
        %1459 = vmatprep.subr.mxu0 0.0
        %1460 = vmatpush1.msra.mxu0 0.0
        %1461 = vmatprep.subr.mxu0 0.0
        %1462 = vmatpush1.msra.mxu0 0.0
        %1463 = vmatprep.subr.mxu0 0.0
        %1464 = vmatpush1.msra.mxu0 0.0
        %1465 = vmatprep.subr.mxu0 0.0
        %1466 = vmatpush1.msra.mxu0 0.0
        %1467 = vmatprep.subr.mxu0 0.0
        %1468 = vmatpush1.msra.mxu0 0.0
        %1469 = vmatprep.mubr.f32.mxu0 0.0
        %v1470 = vand.u32 %v1123, 4294901760
        %v1471 = vsub.f32 %v1123, %v1470
        %1472 = vmatmul.mubr.f32.gmra.mrb[0].mxu0 %v1471
        %v1473 = vpop.f32.mrb[0].mxu0
        %v1474 = vadd.f32 %v1358, %v1473
        %v1475 = vpop.f32.mrb[0].mxu0
        %1476 = vmatprep.mubr.f32.mxu0 0.0
        %v1477 = vand.u32 %v1125, 4294901760
        %v1478 = vsub.f32 %v1125, %v1477
        %1479 = vmatmul.mubr.f32.gmra.mrb[0].mxu0 %v1478
        %v1480 = vpop.f32.mrb[0].mxu0
        %v1481 = vadd.f32 %v1364, %v1480
        %v1482 = vpop.f32.mrb[0].mxu0
        %1483 = vmatprep.mubr.f32.mxu0 0.0
        %v1484 = vand.u32 %v1127, 4294901760
        %v1485 = vsub.f32 %v1127, %v1484
        %1486 = vmatmul.mubr.f32.gmra.mrb[0].mxu0 %v1485
        %v1487 = vpop.f32.mrb[0].mxu0
        %v1488 = vadd.f32 %v1370, %v1487
        %v1489 = vpop.f32.mrb[0].mxu0
        %1490 = vmatprep.mubr.f32.mxu0 0.0
        %v1491 = vand.u32 %v1129, 4294901760
        %v1492 = vsub.f32 %v1129, %v1491
        %1493 = vmatmul.mubr.f32.gmra.mrb[0].mxu0 %v1492
        %v1494 = vpop.f32.mrb[0].mxu0
        %v1495 = vadd.f32 %v1376, %v1494
        %v1496 = vpop.f32.mrb[0].mxu0
        %1497 = vmatprep.mubr.f32.mxu0 0.0
        %v1498 = vand.u32 %v1131, 4294901760
        %v1499 = vsub.f32 %v1131, %v1498
        %1500 = vmatmul.mubr.f32.gmra.mrb[0].mxu0 %v1499
        %v1501 = vpop.f32.mrb[0].mxu0
        %v1502 = vadd.f32 %v1382, %v1501
        %v1503 = vpop.f32.mrb[0].mxu0
        %1504 = vmatprep.mubr.f32.mxu0 0.0
        %v1505 = vand.u32 %v1133, 4294901760
        %v1506 = vsub.f32 %v1133, %v1505
        %1507 = vmatmul.mubr.f32.gmra.mrb[0].mxu0 %v1506
        %v1508 = vpop.f32.mrb[0].mxu0
        %v1509 = vadd.f32 %v1388, %v1508
        %v1510 = vpop.f32.mrb[0].mxu0
        %1511 = vmatprep.mubr.f32.mxu0 0.0
        %v1512 = vand.u32 %v1135, 4294901760
        %v1513 = vsub.f32 %v1135, %v1512
        %1514 = vmatmul.mubr.f32.gmra.mrb[0].mxu0 %v1513
        %v1515 = vpop.f32.mrb[0].mxu0
        %v1516 = vadd.f32 %v1394, %v1515
        %v1517 = vpop.f32.mrb[0].mxu0
        %1518 = vmatprep.mubr.f32.mxu0 0.0
        %v1519 = vand.u32 %v1137, 4294901760
        %v1520 = vsub.f32 %v1137, %v1519
        %1521 = vmatmul.mubr.f32.gmra.mrb[0].mxu0 %v1520
        %v1522 = vpop.f32.mrb[0].mxu0
        %v1523 = vadd.f32 %v1400, %v1522
        %v1524 = vpop.f32.mrb[0].mxu0
        %1525 = vdwg.mxu0
        %1526 = vmatprep.subr.mxu0 0.0
        %v1527 = vand.u32 %v334, 4294901760
        %1528 = vmatpush1.msra.mxu0 %v1527
        %1529 = vmatprep.subr.mxu0 0.0
        %1530 = vmatpush1.msra.mxu0 0.0
        %1531 = vmatprep.subr.mxu0 0.0
        %1532 = vmatpush1.msra.mxu0 0.0
        %1533 = vmatprep.subr.mxu0 0.0
        %1534 = vmatpush1.msra.mxu0 0.0
        %1535 = vmatprep.subr.mxu0 0.0
        %1536 = vmatpush1.msra.mxu0 0.0
        %1537 = vmatprep.subr.mxu0 0.0
        %1538 = vmatpush1.msra.mxu0 0.0
        %1539 = vmatprep.subr.mxu0 0.0
        %1540 = vmatpush1.msra.mxu0 0.0
        %1541 = vmatprep.subr.mxu0 0.0
        %1542 = vmatpush1.msra.mxu0 0.0
        %1543 = vmatprep.subr.mxu0 0.0
        %1544 = vmatpush1.msra.mxu0 0.0
        %1545 = vmatprep.subr.mxu0 0.0
        %1546 = vmatpush1.msra.mxu0 0.0
        %1547 = vmatprep.subr.mxu0 0.0
        %1548 = vmatpush1.msra.mxu0 0.0
        %1549 = vmatprep.subr.mxu0 0.0
        %1550 = vmatpush1.msra.mxu0 0.0
        %1551 = vmatprep.subr.mxu0 0.0
        %1552 = vmatpush1.msra.mxu0 0.0
        %1553 = vmatprep.subr.mxu0 0.0
        %1554 = vmatpush1.msra.mxu0 0.0
        %1555 = vmatprep.subr.mxu0 0.0
        %1556 = vmatpush1.msra.mxu0 0.0
        %1557 = vmatprep.subr.mxu0 0.0
        %1558 = vmatpush1.msra.mxu0 0.0
        %1559 = vmatprep.subr.mxu0 0.0
        %1560 = vmatpush1.msra.mxu0 0.0
        %1561 = vmatprep.subr.mxu0 0.0
        %1562 = vmatpush1.msra.mxu0 0.0
        %1563 = vmatprep.subr.mxu0 0.0
        %1564 = vmatpush1.msra.mxu0 0.0
        %1565 = vmatprep.subr.mxu0 0.0
        %1566 = vmatpush1.msra.mxu0 0.0
        %1567 = vmatprep.subr.mxu0 0.0
        %1568 = vmatpush1.msra.mxu0 0.0
        %1569 = vmatprep.subr.mxu0 0.0
        %1570 = vmatpush1.msra.mxu0 0.0
        %1571 = vmatprep.subr.mxu0 0.0
        %1572 = vmatpush1.msra.mxu0 0.0
        %1573 = vmatprep.subr.mxu0 0.0
        %1574 = vmatpush1.msra.mxu0 0.0
        %1575 = vmatprep.subr.mxu0 0.0
        %1576 = vmatpush1.msra.mxu0 0.0
        %1577 = vmatprep.subr.mxu0 0.0
        %1578 = vmatpush1.msra.mxu0 0.0
        %1579 = vmatprep.subr.mxu0 0.0
        %1580 = vmatpush1.msra.mxu0 0.0
        %1581 = vmatprep.subr.mxu0 0.0
        %1582 = vmatpush1.msra.mxu0 0.0
        %1583 = vmatprep.subr.mxu0 0.0
        %1584 = vmatpush1.msra.mxu0 0.0
        %1585 = vmatprep.subr.mxu0 0.0
        %1586 = vmatpush1.msra.mxu0 0.0
        %1587 = vmatprep.subr.mxu0 0.0
        %1588 = vmatpush1.msra.mxu0 0.0
        %1589 = vmatprep.subr.mxu0 0.0
        %1590 = vmatpush1.msra.mxu0 0.0
        %1591 = vmatprep.mubr.f32.mxu0 0.0
        %v1592 = vand.u32 %v1123, 4294901760
        %v1593 = vsub.f32 %v1123, %v1592
        %v1594 = vand.u32 %v1593, 4294901760
        %1595 = vmatmul.mubr.f32.gmra.mrb[0].mxu0 %v1594
        %v1596 = vpop.f32.mrb[0].mxu0
        %v1597 = vadd.f32 %v1474, %v1596
        %v1598 = vpop.f32.mrb[0].mxu0
        %1599 = vmatprep.mubr.f32.mxu0 0.0
        %v1600 = vand.u32 %v1125, 4294901760
        %v1601 = vsub.f32 %v1125, %v1600
        %v1602 = vand.u32 %v1601, 4294901760
        %1603 = vmatmul.mubr.f32.gmra.mrb[0].mxu0 %v1602
        %v1604 = vpop.f32.mrb[0].mxu0
        %v1605 = vadd.f32 %v1481, %v1604
        %v1606 = vpop.f32.mrb[0].mxu0
        %1607 = vmatprep.mubr.f32.mxu0 0.0
        %v1608 = vand.u32 %v1127, 4294901760
        %v1609 = vsub.f32 %v1127, %v1608
        %v1610 = vand.u32 %v1609, 4294901760
        %1611 = vmatmul.mubr.f32.gmra.mrb[0].mxu0 %v1610
        %v1612 = vpop.f32.mrb[0].mxu0
        %v1613 = vadd.f32 %v1488, %v1612
        %v1614 = vpop.f32.mrb[0].mxu0
        %1615 = vmatprep.mubr.f32.mxu0 0.0
        %v1616 = vand.u32 %v1129, 4294901760
        %v1617 = vsub.f32 %v1129, %v1616
        %v1618 = vand.u32 %v1617, 4294901760
        %1619 = vmatmul.mubr.f32.gmra.mrb[0].mxu0 %v1618
        %v1620 = vpop.f32.mrb[0].mxu0
        %v1621 = vadd.f32 %v1495, %v1620
        %v1622 = vpop.f32.mrb[0].mxu0
        %1623 = vmatprep.mubr.f32.mxu0 0.0
        %v1624 = vand.u32 %v1131, 4294901760
        %v1625 = vsub.f32 %v1131, %v1624
        %v1626 = vand.u32 %v1625, 4294901760
        %1627 = vmatmul.mubr.f32.gmra.mrb[0].mxu0 %v1626
        %v1628 = vpop.f32.mrb[0].mxu0
        %v1629 = vadd.f32 %v1502, %v1628
        %v1630 = vpop.f32.mrb[0].mxu0
        %1631 = vmatprep.mubr.f32.mxu0 0.0
        %v1632 = vand.u32 %v1133, 4294901760
        %v1633 = vsub.f32 %v1133, %v1632
        %v1634 = vand.u32 %v1633, 4294901760
        %1635 = vmatmul.mubr.f32.gmra.mrb[0].mxu0 %v1634
        %v1636 = vpop.f32.mrb[0].mxu0
        %v1637 = vadd.f32 %v1509, %v1636
        %v1638 = vpop.f32.mrb[0].mxu0
        %1639 = vmatprep.mubr.f32.mxu0 0.0
        %v1640 = vand.u32 %v1135, 4294901760
        %v1641 = vsub.f32 %v1135, %v1640
        %v1642 = vand.u32 %v1641, 4294901760
        %1643 = vmatmul.mubr.f32.gmra.mrb[0].mxu0 %v1642
        %v1644 = vpop.f32.mrb[0].mxu0
        %v1645 = vadd.f32 %v1516, %v1644
        %v1646 = vpop.f32.mrb[0].mxu0
        %1647 = vmatprep.mubr.f32.mxu0 0.0
        %v1648 = vand.u32 %v1137, 4294901760
        %v1649 = vsub.f32 %v1137, %v1648
        %v1650 = vand.u32 %v1649, 4294901760
        %1651 = vmatmul.mubr.f32.gmra.mrb[0].mxu0 %v1650
        %v1652 = vpop.f32.mrb[0].mxu0
        %v1653 = vadd.f32 %v1523, %v1652
        %v1654 = vpop.f32.mrb[0].mxu0
        %1655 = vdwg.mxu0
        %1656 = vmatprep.subr.mxu0 0.0
        %v1657 = vand.u32 %v334, 4294901760
        %v1658 = vsub.f32 %v334, %v1657
        %v1659 = vand.u32 %v1658, 4294901760
        %1660 = vmatpush1.msra.mxu0 %v1659
        %1661 = vmatprep.subr.mxu0 0.0
        %1662 = vmatpush1.msra.mxu0 0.0
        %1663 = vmatprep.subr.mxu0 0.0
        %1664 = vmatpush1.msra.mxu0 0.0
        %1665 = vmatprep.subr.mxu0 0.0
        %1666 = vmatpush1.msra.mxu0 0.0
        %1667 = vmatprep.subr.mxu0 0.0
        %1668 = vmatpush1.msra.mxu0 0.0
        %1669 = vmatprep.subr.mxu0 0.0
        %1670 = vmatpush1.msra.mxu0 0.0
        %1671 = vmatprep.subr.mxu0 0.0
        %1672 = vmatpush1.msra.mxu0 0.0
        %1673 = vmatprep.subr.mxu0 0.0
        %1674 = vmatpush1.msra.mxu0 0.0
        %1675 = vmatprep.subr.mxu0 0.0
        %1676 = vmatpush1.msra.mxu0 0.0
        %1677 = vmatprep.subr.mxu0 0.0
        %1678 = vmatpush1.msra.mxu0 0.0
        %1679 = vmatprep.subr.mxu0 0.0
        %1680 = vmatpush1.msra.mxu0 0.0
        %1681 = vmatprep.subr.mxu0 0.0
        %1682 = vmatpush1.msra.mxu0 0.0
        %1683 = vmatprep.subr.mxu0 0.0
        %1684 = vmatpush1.msra.mxu0 0.0
        %1685 = vmatprep.subr.mxu0 0.0
        %1686 = vmatpush1.msra.mxu0 0.0
        %1687 = vmatprep.subr.mxu0 0.0
        %1688 = vmatpush1.msra.mxu0 0.0
        %1689 = vmatprep.subr.mxu0 0.0
        %1690 = vmatpush1.msra.mxu0 0.0
        %1691 = vmatprep.subr.mxu0 0.0
        %1692 = vmatpush1.msra.mxu0 0.0
        %1693 = vmatprep.subr.mxu0 0.0
        %1694 = vmatpush1.msra.mxu0 0.0
        %1695 = vmatprep.subr.mxu0 0.0
        %1696 = vmatpush1.msra.mxu0 0.0
        %1697 = vmatprep.subr.mxu0 0.0
        %1698 = vmatpush1.msra.mxu0 0.0
        %1699 = vmatprep.subr.mxu0 0.0
        %1700 = vmatpush1.msra.mxu0 0.0
        %1701 = vmatprep.subr.mxu0 0.0
        %1702 = vmatpush1.msra.mxu0 0.0
        %1703 = vmatprep.subr.mxu0 0.0
        %1704 = vmatpush1.msra.mxu0 0.0
        %1705 = vmatprep.subr.mxu0 0.0
        %1706 = vmatpush1.msra.mxu0 0.0
        %1707 = vmatprep.subr.mxu0 0.0
        %1708 = vmatpush1.msra.mxu0 0.0
        %1709 = vmatprep.subr.mxu0 0.0
        %1710 = vmatpush1.msra.mxu0 0.0
        %1711 = vmatprep.subr.mxu0 0.0
        %1712 = vmatpush1.msra.mxu0 0.0
        %1713 = vmatprep.subr.mxu0 0.0
        %1714 = vmatpush1.msra.mxu0 0.0
        %1715 = vmatprep.subr.mxu0 0.0
        %1716 = vmatpush1.msra.mxu0 0.0
        %1717 = vmatprep.subr.mxu0 0.0
        %1718 = vmatpush1.msra.mxu0 0.0
        %1719 = vmatprep.subr.mxu0 0.0
        %1720 = vmatpush1.msra.mxu0 0.0
        %1721 = vmatprep.subr.mxu0 0.0
        %1722 = vmatpush1.msra.mxu0 0.0
        %1723 = vmatprep.mubr.f32.mxu0 0.0
        %v1724 = vand.u32 %v1123, 4294901760
        %1725 = vmatmul.mubr.f32.gmra.mrb[0].mxu0 %v1724
        %v1726 = vpop.f32.mrb[0].mxu0
        %v1727 = vadd.f32 %v1597, %v1726
        %v1728 = vpop.f32.mrb[0].mxu0
        %1729 = vmatprep.mubr.f32.mxu0 0.0
        %v1730 = vand.u32 %v1125, 4294901760
        %1731 = vmatmul.mubr.f32.gmra.mrb[0].mxu0 %v1730
        %v1732 = vpop.f32.mrb[0].mxu0
        %v1733 = vadd.f32 %v1605, %v1732
        %v1734 = vpop.f32.mrb[0].mxu0
        %1735 = vmatprep.mubr.f32.mxu0 0.0
        %v1736 = vand.u32 %v1127, 4294901760
        %1737 = vmatmul.mubr.f32.gmra.mrb[0].mxu0 %v1736
        %v1738 = vpop.f32.mrb[0].mxu0
        %v1739 = vadd.f32 %v1613, %v1738
        %v1740 = vpop.f32.mrb[0].mxu0
        %1741 = vmatprep.mubr.f32.mxu0 0.0
        %v1742 = vand.u32 %v1129, 4294901760
        %1743 = vmatmul.mubr.f32.gmra.mrb[0].mxu0 %v1742
        %v1744 = vpop.f32.mrb[0].mxu0
        %v1745 = vadd.f32 %v1621, %v1744
        %v1746 = vpop.f32.mrb[0].mxu0
        %1747 = vmatprep.mubr.f32.mxu0 0.0
        %v1748 = vand.u32 %v1131, 4294901760
        %1749 = vmatmul.mubr.f32.gmra.mrb[0].mxu0 %v1748
        %v1750 = vpop.f32.mrb[0].mxu0
        %v1751 = vadd.f32 %v1629, %v1750
        %v1752 = vpop.f32.mrb[0].mxu0
        %1753 = vmatprep.mubr.f32.mxu0 0.0
        %v1754 = vand.u32 %v1133, 4294901760
        %1755 = vmatmul.mubr.f32.gmra.mrb[0].mxu0 %v1754
        %v1756 = vpop.f32.mrb[0].mxu0
        %v1757 = vadd.f32 %v1637, %v1756
        %v1758 = vpop.f32.mrb[0].mxu0
        %1759 = vmatprep.mubr.f32.mxu0 0.0
        %v1760 = vand.u32 %v1135, 4294901760
        %1761 = vmatmul.mubr.f32.gmra.mrb[0].mxu0 %v1760
        %v1762 = vpop.f32.mrb[0].mxu0
        %v1763 = vadd.f32 %v1645, %v1762
        %v1764 = vpop.f32.mrb[0].mxu0
        %1765 = vmatprep.mubr.f32.mxu0 0.0
        %v1766 = vand.u32 %v1137, 4294901760
        %1767 = vmatmul.mubr.f32.gmra.mrb[0].mxu0 %v1766
        %v1768 = vpop.f32.mrb[0].mxu0
        %v1769 = vadd.f32 %v1653, %v1768
        %v1770 = vpop.f32.mrb[0].mxu0
        %1771 = vdwg.mxu0
        %1772 = vmatprep.subr.mxu0 0.0
        %v1773 = vand.u32 %v334, 4294901760
        %1774 = vmatpush1.msra.mxu0 %v1773
        %1775 = vmatprep.subr.mxu0 0.0
        %1776 = vmatpush1.msra.mxu0 0.0
        %1777 = vmatprep.subr.mxu0 0.0
        %1778 = vmatpush1.msra.mxu0 0.0
        %1779 = vmatprep.subr.mxu0 0.0
        %1780 = vmatpush1.msra.mxu0 0.0
        %1781 = vmatprep.subr.mxu0 0.0
        %1782 = vmatpush1.msra.mxu0 0.0
        %1783 = vmatprep.subr.mxu0 0.0
        %1784 = vmatpush1.msra.mxu0 0.0
        %1785 = vmatprep.subr.mxu0 0.0
        %1786 = vmatpush1.msra.mxu0 0.0
        %1787 = vmatprep.subr.mxu0 0.0
        %1788 = vmatpush1.msra.mxu0 0.0
        %1789 = vmatprep.subr.mxu0 0.0
        %1790 = vmatpush1.msra.mxu0 0.0
        %1791 = vmatprep.subr.mxu0 0.0
        %1792 = vmatpush1.msra.mxu0 0.0
        %1793 = vmatprep.subr.mxu0 0.0
        %1794 = vmatpush1.msra.mxu0 0.0
        %1795 = vmatprep.subr.mxu0 0.0
        %1796 = vmatpush1.msra.mxu0 0.0
        %1797 = vmatprep.subr.mxu0 0.0
        %1798 = vmatpush1.msra.mxu0 0.0
        %1799 = vmatprep.subr.mxu0 0.0
        %1800 = vmatpush1.msra.mxu0 0.0
        %1801 = vmatprep.subr.mxu0 0.0
        %1802 = vmatpush1.msra.mxu0 0.0
        %1803 = vmatprep.subr.mxu0 0.0
        %1804 = vmatpush1.msra.mxu0 0.0
        %1805 = vmatprep.subr.mxu0 0.0
        %1806 = vmatpush1.msra.mxu0 0.0
        %1807 = vmatprep.subr.mxu0 0.0
        %1808 = vmatpush1.msra.mxu0 0.0
        %1809 = vmatprep.subr.mxu0 0.0
        %1810 = vmatpush1.msra.mxu0 0.0
        %1811 = vmatprep.subr.mxu0 0.0
        %1812 = vmatpush1.msra.mxu0 0.0
        %1813 = vmatprep.subr.mxu0 0.0
        %1814 = vmatpush1.msra.mxu0 0.0
        %1815 = vmatprep.subr.mxu0 0.0
        %1816 = vmatpush1.msra.mxu0 0.0
        %1817 = vmatprep.subr.mxu0 0.0
        %1818 = vmatpush1.msra.mxu0 0.0
        %1819 = vmatprep.subr.mxu0 0.0
        %1820 = vmatpush1.msra.mxu0 0.0
        %1821 = vmatprep.subr.mxu0 0.0
        %1822 = vmatpush1.msra.mxu0 0.0
        %1823 = vmatprep.subr.mxu0 0.0
        %1824 = vmatpush1.msra.mxu0 0.0
        %1825 = vmatprep.subr.mxu0 0.0
        %1826 = vmatpush1.msra.mxu0 0.0
        %1827 = vmatprep.subr.mxu0 0.0
        %1828 = vmatpush1.msra.mxu0 0.0
        %1829 = vmatprep.subr.mxu0 0.0
        %1830 = vmatpush1.msra.mxu0 0.0
        %1831 = vmatprep.subr.mxu0 0.0
        %1832 = vmatpush1.msra.mxu0 0.0
        %1833 = vmatprep.subr.mxu0 0.0
        %1834 = vmatpush1.msra.mxu0 0.0
        %1835 = vmatprep.subr.mxu0 0.0
        %1836 = vmatpush1.msra.mxu0 0.0
        %1837 = vmatprep.mubr.f32.mxu0 0.0
        %v1838 = vand.u32 %v1123, 4294901760
        %1839 = vmatmul.mubr.f32.gmra.mrb[0].mxu0 %v1838
        %v1840 = vpop.f32.mrb[0].mxu0
        %v1841 = vadd.f32 %v1727, %v1840
        %v1842 = vpop.f32.mrb[0].mxu0
        %1843 = vmatprep.mubr.f32.mxu0 0.0
        %v1844 = vand.u32 %v1125, 4294901760
        %1845 = vmatmul.mubr.f32.gmra.mrb[0].mxu0 %v1844
        %v1846 = vpop.f32.mrb[0].mxu0
        %v1847 = vadd.f32 %v1733, %v1846
        %v1848 = vpop.f32.mrb[0].mxu0
        %1849 = vmatprep.mubr.f32.mxu0 0.0
        %v1850 = vand.u32 %v1127, 4294901760
        %1851 = vmatmul.mubr.f32.gmra.mrb[0].mxu0 %v1850
        %v1852 = vpop.f32.mrb[0].mxu0
        %v1853 = vadd.f32 %v1739, %v1852
        %v1854 = vpop.f32.mrb[0].mxu0
        %1855 = vmatprep.mubr.f32.mxu0 0.0
        %v1856 = vand.u32 %v1129, 4294901760
        %1857 = vmatmul.mubr.f32.gmra.mrb[0].mxu0 %v1856
        %v1858 = vpop.f32.mrb[0].mxu0
        %v1859 = vadd.f32 %v1745, %v1858
        %v1860 = vpop.f32.mrb[0].mxu0
        %1861 = vmatprep.mubr.f32.mxu0 0.0
        %v1862 = vand.u32 %v1131, 4294901760
        %1863 = vmatmul.mubr.f32.gmra.mrb[0].mxu0 %v1862
        %v1864 = vpop.f32.mrb[0].mxu0
        %v1865 = vadd.f32 %v1751, %v1864
        %v1866 = vpop.f32.mrb[0].mxu0
        %1867 = vmatprep.mubr.f32.mxu0 0.0
        %v1868 = vand.u32 %v1133, 4294901760
        %1869 = vmatmul.mubr.f32.gmra.mrb[0].mxu0 %v1868
        %v1870 = vpop.f32.mrb[0].mxu0
        %v1871 = vadd.f32 %v1757, %v1870
        %v1872 = vpop.f32.mrb[0].mxu0
        %1873 = vmatprep.mubr.f32.mxu0 0.0
        %v1874 = vand.u32 %v1135, 4294901760
        %1875 = vmatmul.mubr.f32.gmra.mrb[0].mxu0 %v1874
        %v1876 = vpop.f32.mrb[0].mxu0
        %v1877 = vadd.f32 %v1763, %v1876
        %v1878 = vpop.f32.mrb[0].mxu0
        %1879 = vmatprep.mubr.f32.mxu0 0.0
        %v1880 = vand.u32 %v1137, 4294901760
        %1881 = vmatmul.mubr.f32.gmra.mrb[0].mxu0 %v1880
        %v1882 = vpop.f32.mrb[0].mxu0
        %v1883 = vadd.f32 %v1769, %v1882
        %v1884 = vpop.f32.mrb[0].mxu0
        %1885 = vdwg.mxu0
        %1894 = vrot.lane.b32.xlu0 %v1841, 64
        %v1895 = vpop.permute.xlu0 %1894
        %1896 = vrot.lane.b32.xlu0 %v1847, 64
        %v1897 = vpop.permute.xlu0 %1896
        %1898 = vrot.lane.b32.xlu0 %v1853, 64
        %v1899 = vpop.permute.xlu0 %1898
        %1900 = vrot.lane.b32.xlu0 %v1859, 64
        %v1901 = vpop.permute.xlu0 %1900
        %1902 = vrot.lane.b32.xlu0 %v1865, 64
        %v1903 = vpop.permute.xlu0 %1902
        %1904 = vrot.lane.b32.xlu0 %v1871, 64
        %v1905 = vpop.permute.xlu0 %1904
        %1906 = vrot.lane.b32.xlu0 %v1877, 64
        %v1907 = vpop.permute.xlu0 %1906
        %1908 = vrot.lane.b32.xlu0 %v1883, 64
        %v1909 = vpop.permute.xlu0 %1908
        %vm1918 = vcmask 523264
        %v1919 = vsel %vm1918, %v1062, %v1895
        %v1920 = vsel %vm1918, %v1068, %v1897
        %v1921 = vsel %vm1918, %v1074, %v1899
        %v1922 = vsel %vm1918, %v1080, %v1901
        %v1923 = vsel %vm1918, %v1086, %v1903
        %v1924 = vsel %vm1918, %v1092, %v1905
        %v1925 = vsel %vm1918, %v1098, %v1907
        %v1926 = vsel %vm1918, %v1104, %v1909
        %v1927 = vtanh.pop %v1919
        %v1928 = vtanh.pop %v1920
        %v1929 = vtanh.pop %v1921
        %v1930 = vtanh.pop %v1922
        %v1931 = vtanh.pop %v1923
        %v1932 = vtanh.pop %v1924
        %v1933 = vtanh.pop %v1925
        %v1934 = vtanh.pop %v1926
        %1935 = vst [vmem:[%s164] sm:$0xff] %v1927
        %1936 = vst [vmem:[%s164 + $0x8] sm:$0xff] %v1928
        %1937 = vst [vmem:[%s164 + $0x10] sm:$0xff] %v1929
        %1938 = vst [vmem:[%s164 + $0x18] sm:$0xff] %v1930
        %1939 = vst [vmem:[%s164 + $0x20] sm:$0xff] %v1931
        %1940 = vst [vmem:[%s164 + $0x28] sm:$0xff] %v1932
        %1941 = vst [vmem:[%s164 + $0x30] sm:$0xff] %v1933
        %1942 = vst [vmem:[%s164 + $0x38] sm:$0xff] %v1934
        %s1943 = sand.u32 %s93, 1
        %s1944 = scalar_lea.sflag [#allocation3], %s1943
        %s1945 = sand.u32 %s93, 1
        %s1946 = smul.addr %s1945, 64
        %s1947 = scalar_lea.vmem [#allocation2], %s1946
        // Predicated region
        $region33: #{tpu_custom_call.1} parent=31 // pred_check
          %p1948 = pneg %p103
        $region34: #{tpu_custom_call.1} parent=31 // pred_check_branch
          %1950 = sbr.rel (%p1948) target = $region36
        $region35: #{tpu_custom_call.1} parent=31 // pred_region
          %s1951 = smul.u32 8, %s17
          %s1953 = ssub.s32 1024, 1024
          %1954 = vsyncadd %s1944, %s1953
          %s1955 = smul.addr %s1951, 128
          %s1956 = scalar_lea.hbm %s3, %s1955
          %s1957 = sshll.u32 %s1947, 4
          %s1958 = int_to_ptr.vmem [resolvable:$true] %s1957
          %1963 = dma.vmem_to_hbm [thread:$0]  %s1958, 1024, %s1956, %s1944, 128, 128, 8
        $region36: #{tpu_custom_call.1} parent=31 // pred_fallthru
          _
      $region32: #{tpu_custom_call.1} parent=5 // pred_fallthru
        _
      %p1964 = scmp.le.s32.totalorder 2, %s12
      // Predicated region
      $region37: #{tpu_custom_call.1} parent=5 // pred_check
        %p1965 = pneg %p1964
      $region38: #{tpu_custom_call.1} parent=5 // pred_check_branch
        %1967 = sbr.rel (%p1965) target = $region40
      $region39: #{tpu_custom_call.1} parent=5 // pred_region
        %s1968 = ssub.s32 %s12, 2
        // Predicated region
        $region41: #{tpu_custom_call.1} parent=39 // pred_check
          %p1969 = pneg %p109
        $region42: #{tpu_custom_call.1} parent=39 // pred_check_branch
          %1971 = sbr.rel (%p1969) target = $region44
        $region43: #{tpu_custom_call.1} parent=39 // pred_region
          %s1972 = sand.u32 %s94, 1
          %s1973 = scalar_lea.sflag [#allocation3], %s1972
          %s1974 = sand.u32 %s94, 1
          %s1975 = smul.addr %s1974, 64
          %s1976 = scalar_lea.vmem [#allocation2], %s1975
          %1977 = dma.done %s1973, 1024
        $region44: #{tpu_custom_call.1} parent=39 // pred_fallthru
          _
      $region40: #{tpu_custom_call.1} parent=5 // pred_fallthru
        _
    $region6: #{tpu_custom_call.1} parent=1 // loop_footer
      %s16 = sadd.s32 1, %s12
    $region7: #{tpu_custom_call.1} parent=1 // loop_footer_branch
      %11 = sbr.rel target = $region3
    $region8: #{tpu_custom_call.1} parent=1 // loop_exit
      _
    %1978 = vsyncpa [#allocation3], 1
    %s1979 = scalar_lea.sflag [#allocation3], 1
    %1980 = vsyncpa %s1979, 1

</llo_original>
